<compile_context>
chip_gen: v6e
topology: v6e:2x2x1
jax: 0.10.0
libtpu: 0.0.40
codegen_flags: <defaults>
</compile_context>

<pallas_src>
import functools

import jax
import jax.numpy as jnp
from jax.experimental import pallas as pl
from jax.experimental.pallas import tpu as pltpu

LEAKY_RELU_SLOPE = 0.3

# Sized so the double-buffered working set fits v7x's 64 MiB/TC; v5e/v6e have
# 128 MiB so this is conservative there.
_VMEM_LIMIT_BYTES = 48 * 1024 * 1024


def _round_up(n, m):
    return ((n + m - 1) // m) * m


# ---------------------------------------------------------------------------
# Pallas kernel 1: fused Conv1d("same") + LeakyReLU stack (2 or 3 layers)
# ---------------------------------------------------------------------------
def _conv_stack_kernel(x_ref, w0_ref, wr_ref, b_ref, o_ref, *, K, L, T, slope):
    # x_ref : (1, C0p, T + 2*L*pad)  bf16  (zero padded: L*pad halo each side,
    #                                      input channels padded to mult. of 8)
    # w0_ref: (C_hid, K*C0p)         bf16  (im2col layout: k-major, c-minor)
    # wr_ref: (L-1, C_hid, K*C_hid)  bf16
    # b_ref : (L, C_hid, 1)          f32
    # o_ref : (1, C_hid, T)          bf16
    pad = K // 2
    h = x_ref[0].astype(jnp.float32)                  # (C0p, T + 2*L*pad)

    for l in range(L):
        ext_out = (L - 1 - l) * pad                   # halo of this layer's out
        w_out = T + 2 * ext_out
        ext_in = ext_out + pad                        # halo of this layer's in
        w_in = w_out + 2 * pad

        # Zero the "virtual" halo columns (positions outside [0, T)) so the
        # shifted slices below see exactly torch's zero padding.  For l == 0
        # they are already zero (wrapper padding) — the mask is a no-op there.
        jidx = jax.lax.broadcasted_iota(jnp.int32, (1, w_in), 1)
        g = jnp.where((jidx >= ext_in) & (jidx < T + ext_in), h, 0.0)

        # In-VMEM im2col: K static lane-shifted slices stacked along sublanes
        # -> (K*C, w_out).  One MXU matmul per layer, contraction dim = K*C.
        im2col = jnp.concatenate([g[:, k:k + w_out] for k in range(K)], axis=0)

        w_l = w0_ref[...] if l == 0 else wr_ref[l - 1]
        acc = jnp.dot(w_l, im2col.astype(jnp.bfloat16),
                      preferred_element_type=jnp.float32)
        acc = acc + b_ref[l]
        h = jnp.where(acc >= 0.0, acc, slope * acc)   # (C_hid, w_out)

    o_ref[0] = h.astype(o_ref.dtype)                  # w_out == T at the end


def conv_stack(x, layers, *, K, slope):
    """Fused Conv1d+LeakyReLU stack.

    x: (B, C_in, T) f32.  layers: list of (w, b) with torch layout
    w: (C_out, C_prev, K), b: (C_out,).  Returns (B, C_hid, T) bf16.
    """
    B, C_in, T = x.shape
    L = len(layers)
    assert L >= 2
    C_hid = layers[0][0].shape[0]
    pad = K // 2
    halo = L * pad

    # Pad input channels to a multiple of 8 (keeps the in-kernel sublane concat
    # tile-aligned) and add the time halo.  This keeps the layer-0 HBM read at
    # ~1x the input size instead of the K x an HBM-side im2col slab would need.
    C0p = _round_up(C_in, 8)
    xp = jnp.pad(x, ((0, 0), (0, C0p - C_in), (halo, halo))).astype(jnp.bfloat16)

    def im2col_weight(w, c_pad):
        c_out, c_prev, ksz = w.shape
        wp = jnp.pad(w, ((0, 0), (0, c_pad - c_prev), (0, 0)))
        return jnp.transpose(wp, (0, 2, 1)).reshape(
            c_out, ksz * c_pad).astype(jnp.bfloat16)

    w0 = im2col_weight(layers[0][0], C0p)                         # (C_hid, K*C0p)
    wr = jnp.stack([im2col_weight(w, C_hid) for w, _ in layers[1:]])
    bias = jnp.stack([b for _, b in layers])[:, :, None].astype(jnp.float32)

    kern = functools.partial(_conv_stack_kernel, K=K, L=L, T=T, slope=slope)
    W_in = T + 2 * halo
    return pl.pallas_call(
        kern,
        out_shape=jax.ShapeDtypeStruct((B, C_hid, T), jnp.bfloat16),
        grid=(B,),
        in_specs=[
            pl.BlockSpec((1, C0p, W_in), lambda bi: (bi, 0, 0)),
            pl.BlockSpec((C_hid, K * C0p), lambda bi: (0, 0)),
            pl.BlockSpec((L - 1, C_hid, K * C_hid), lambda bi: (0, 0, 0)),
            pl.BlockSpec((L, C_hid, 1), lambda bi: (0, 0, 0)),
        ],
        out_specs=pl.BlockSpec((1, C_hid, T), lambda bi: (bi, 0, 0)),
        compiler_params=pltpu.CompilerParams(
            dimension_semantics=("parallel",),
            vmem_limit_bytes=_VMEM_LIMIT_BYTES),
    )(xp, w0, wr, bias)


# ---------------------------------------------------------------------------
# Pallas kernel 2: distance attention + log_softmax + log(prior) + softmax
# ---------------------------------------------------------------------------
def _attn_kernel(q_ref, k_ref, k2_ref, prior_ref, lp_ref, soft_ref, *,
                 temperature):
    # q_ref : (1, tq, H) bf16  (pre-transposed: MXU-ready LHS, no XLU transpose)
    # k_ref : (1, H, T1) bf16  (resident across the T2-tile grid axis)
    # k2_ref: (1, 1, T1) f32   (||k||^2, precomputed once, resident)
    # prior_ref/lp_ref/soft_ref: (1, tq, T1) f32
    qb = q_ref[0]                                    # (tq, H)
    kb = k_ref[0]                                    # (H, T1)
    k2 = k2_ref[0]                                   # (1, T1)

    qk = jnp.dot(qb, kb, preferred_element_type=jnp.float32)   # (tq, T1)

    # -temp * ||q-k||^2 with the q^2 term dropped: it is constant along T1 and
    # cancels exactly in both log_softmax and the subsequent softmax.
    attn = temperature * (2.0 * qk - k2)                        # (tq, T1)

    m = jnp.max(attn, axis=-1, keepdims=True)
    e = jnp.exp(attn - m)                                       # reused below
    s = jnp.sum(e, axis=-1, keepdims=True)

    prior = prior_ref[0] + 1e-8
    lp_ref[0] = attn - (m + jnp.log(s)) + jnp.log(prior)        # log_softmax + log prior

    # softmax(logprob) == (e * prior) / sum(e * prior): reuse e, no second exp.
    w = e * prior
    soft_ref[0] = w / jnp.sum(w, axis=-1, keepdims=True)


def attn_pallas(q_enc, k_enc, prior_p, temperature, *, tq=256):
    """q_enc: (B, H, T2) bf16, k_enc: (B, H, T1) bf16, prior_p: (B, T2, T1) f32."""
    B, H, T2 = q_enc.shape
    T1 = k_enc.shape[2]
    q_t = jnp.transpose(q_enc, (0, 2, 1))            # (B, T2, H) — done in XLA
    kf = k_enc.astype(jnp.float32)
    k2 = jnp.sum(kf * kf, axis=1, keepdims=True)     # (B, 1, T1), computed once
    tq = min(tq, T2)
    grid = (B, pl.cdiv(T2, tq))

    kern = functools.partial(_attn_kernel, temperature=temperature)
    lp, soft = pl.pallas_call(
        kern,
        out_shape=(jax.ShapeDtypeStruct((B, T2, T1), jnp.float32),
                   jax.ShapeDtypeStruct((B, T2, T1), jnp.float32)),
        grid=grid,
        in_specs=[
            pl.BlockSpec((1, tq, H), lambda bi, ti: (bi, ti, 0)),
            pl.BlockSpec((1, H, T1), lambda bi, ti: (bi, 0, 0)),   # K resident
            pl.BlockSpec((1, 1, T1), lambda bi, ti: (bi, 0, 0)),   # ||k||^2 resident
            pl.BlockSpec((1, tq, T1), lambda bi, ti: (bi, ti, 0)),
        ],
        out_specs=(pl.BlockSpec((1, tq, T1), lambda bi, ti: (bi, ti, 0)),
                   pl.BlockSpec((1, tq, T1), lambda bi, ti: (bi, ti, 0))),
        compiler_params=pltpu.CompilerParams(
            dimension_semantics=("parallel", "parallel"),
            vmem_limit_bytes=_VMEM_LIMIT_BYTES),
    )(q_t, k_enc, k2, prior_p)
    return lp, soft


# ---------------------------------------------------------------------------
# MAS binarization (b_mas width=1), plain-JAX replica of the numpy reference.
# TODO(synk): sequential DP + backtrack has no clean Pallas equivalent; done
#             with lax.scan in plain JAX instead of a Pallas kernel.
# ---------------------------------------------------------------------------
def mas_width1_jax(attn_soft_b, in_len, out_len):
    """attn_soft_b: (T2, T1) probabilities; returns hard 0/1 alignment (T2, T1)."""
    T2, T1 = attn_soft_b.shape
    text_idx = jnp.arange(T1, dtype=jnp.int32)
    neg_inf = jnp.float32(-jnp.inf)

    log_attn = jnp.log(attn_soft_b)
    log_attn = jnp.where(text_idx[None, :] < in_len, log_attn, neg_inf)
    row0 = jnp.where(text_idx == 0, log_attn[0], neg_inf)     # attn[0,1:]=-inf

    def fwd(prev, row):
        prev_shift = jnp.concatenate(
            [jnp.full((1,), neg_inf, prev.dtype), prev[:-1]])
        take_diag = (text_idx > 0) & (prev_shift >= prev)
        best_prev = jnp.where(take_diag, prev_shift, prev)
        prev_j = jnp.where(take_diag, text_idx - 1, text_idx)
        logp = row + best_prev
        return logp, prev_j

    _, prev_ind_rest = jax.lax.scan(fwd, row0, log_attn[1:])
    prev_ind = jnp.concatenate(
        [jnp.zeros((1, T1), jnp.int32), prev_ind_rest.astype(jnp.int32)], axis=0)

    def bwd(curr, i):
        active = i < out_len
        row_out = jnp.where(active, (text_idx == curr).astype(jnp.float32),
                            jnp.zeros((T1,), jnp.float32))
        new_curr = jnp.where(active, prev_ind[i, curr], curr)
        return new_curr, row_out

    _, opt_rev = jax.lax.scan(bwd, (in_len - 1).astype(jnp.int32),
                              jnp.arange(T2 - 1, -1, -1, dtype=jnp.int32))
    opt = opt_rev[::-1]
    # replicate trailing `opt[0, curr_text_idx] = 1` (prev_ind row 0 is zeros)
    opt = opt.at[0, 0].set(jnp.float32(1.0))
    return opt


# ---------------------------------------------------------------------------
# Aligner forward
# ---------------------------------------------------------------------------
def aligner_forward(params, enc_in, dec_in, enc_len, dec_len, enc_mask,
                    attn_prior, *, temperature=0.0005, slope=LEAKY_RELU_SLOPE):
    keys = enc_in.astype(jnp.float32)
    queries = dec_in.astype(jnp.float32)

    k_ksize = params["key_proj"][0][0].shape[2]
    q_ksize = params["query_proj"][0][0].shape[2]
    k_enc = conv_stack(keys, params["key_proj"], K=k_ksize, slope=slope)       # (B,H,T1)
    q_enc = conv_stack(queries, params["query_proj"], K=q_ksize, slope=slope)  # (B,H,T2)

    prior_p = jnp.transpose(attn_prior, (0, 2, 1)).astype(jnp.float32)  # (B,T2,T1)
    lp, soft = attn_pallas(q_enc, k_enc, prior_p, temperature)

    attn_logprob = lp[:, None]                 # (B, 1, T2, T1)
    # NOTE: the torch code calls `attn.masked_fill(...)` WITHOUT assignment
    # (out-of-place, result discarded) -> it is a no-op, so enc_mask is not
    # applied here either, faithfully reproducing the reference semantics.
    del enc_mask
    attn_soft = soft[:, None]                  # (B, 1, T2, T1)

    attn_hard_2d = jax.vmap(mas_width1_jax)(attn_soft[:, 0],
                                            enc_len.astype(jnp.int32),
                                            dec_len.astype(jnp.int32))
    attn_hard = attn_hard_2d[:, None]          # (B, 1, T2, T1)
    attn_hard_dur = attn_hard.sum(2)[:, 0, :]  # (B, T1)
    return attn_logprob, attn_soft, attn_hard, attn_hard_dur


# ---------------------------------------------------------------------------
# Deterministic parameter init (Conv1d-style uniform fan-in init)
# ---------------------------------------------------------------------------
def init_params(key, d_enc_in, d_dec_in, d_hidden, k_enc=3, k_dec=7):
    ks = jax.random.split(key, 5)

    def conv_p(k, c_out, c_in, ksize):
        kw, kb = jax.random.split(k)
        scale = 1.0 / jnp.sqrt(jnp.float32(c_in * ksize))
        w = jax.random.uniform(kw, (c_out, c_in, ksize), jnp.float32,
                               -scale, scale)
        b = jax.random.uniform(kb, (c_out,), jnp.float32, -scale, scale)
        return w, b

    key_proj = [conv_p(ks[0], d_hidden, d_enc_in, k_enc),
                conv_p(ks[1], d_hidden, d_hidden, k_enc)]
    query_proj = [conv_p(ks[2], d_hidden, d_dec_in, k_dec),
                  conv_p(ks[3], d_hidden, d_hidden, k_dec),
                  conv_p(ks[4], d_hidden, d_hidden, k_dec)]
    return {"key_proj": key_proj, "query_proj": query_proj}


if __name__ == "__main__":
    B = 2
    d_enc_in, d_dec_in, d_hidden = 4, 8, 32
    T1, T2 = 8, 16  # text / mel lengths

    root = jax.random.PRNGKey(0)
    kp, k1, k2, k3 = jax.random.split(root, 4)

    params = init_params(kp, d_enc_in, d_dec_in, d_hidden)

    enc_in = jax.random.normal(k1, (B, d_enc_in, T1), jnp.float32)
    dec_in = jax.random.normal(k2, (B, d_dec_in, T2), jnp.float32)
    enc_len = jnp.array([T1, T1 - 2], jnp.int32)
    dec_len = jnp.array([T2, T2 - 4], jnp.int32)
    enc_mask = jnp.arange(T1)[None, :] >= enc_len[:, None]          # (B, T1) bool
    # attn_prior: (B, T1, T2), strictly positive (prior probabilities)
    attn_prior = jax.nn.softmax(
        jax.random.normal(k3, (B, T1, T2), jnp.float32), axis=1)

    fwd = jax.jit(aligner_forward)
    outs = jax.block_until_ready(
        fwd(params, enc_in, dec_in, enc_len, dec_len, enc_mask, attn_prior))

    attn_logprob, attn_soft, attn_hard, attn_hard_dur = outs
    assert attn_logprob.shape == (B, 1, T2, T1)
    assert attn_soft.shape == (B, 1, T2, T1)
    assert attn_hard.shape == (B, 1, T2, T1)
    assert attn_hard_dur.shape == (B, T1)
    # soft attention rows form a proper distribution over the text axis
    row_sums = attn_soft[:, 0].sum(-1)
    assert bool(jnp.all(jnp.abs(row_sums - 1.0) < 1e-3))
    # hard attention assigns exactly one text token per active mel frame
    assert bool(jnp.all(
        jnp.abs(attn_hard_dur.sum(-1) - dec_len.astype(jnp.float32)) < 0.5))
    print("KERNEL_OK")
</pallas_src>

<mosaic_0001>
module attributes {stable_mosaic.version = 11 : i64} {
  func.func @_conv_stack_kernel(%arg0: i32, %arg1: memref<1x8x34xbf16, #tpu.memory_space<vmem>>, %arg2: memref<32x56xbf16, #tpu.memory_space<vmem>>, %arg3: memref<2x32x224xbf16, #tpu.memory_space<vmem>>, %arg4: memref<3x32x1xf32, #tpu.memory_space<vmem>>, %arg5: memref<1x32x16xbf16, #tpu.memory_space<vmem>>) attributes {dimension_semantics = [#tpu.dimension_semantics<parallel>], iteration_bounds = array<i64: 2>, scalar_prefetch = 0 : i64, scratch_operands = 0 : i64, tpu.core_type = #tpu.core_type<tc>, window_params = [{transform_indices = @transform_0, window_bounds = array<i64: 1, 8, 34>}, {pipeline_mode = #tpu.pipeline_mode<synchronous>, transform_indices = @transform_1, window_bounds = array<i64: 32, 56>}, {pipeline_mode = #tpu.pipeline_mode<synchronous>, transform_indices = @transform_2, window_bounds = array<i64: 2, 32, 224>}, {pipeline_mode = #tpu.pipeline_mode<synchronous>, transform_indices = @transform_3, window_bounds = array<i64: 3, 32, 1>}, {transform_indices = @transform_4, window_bounds = array<i64: 1, 32, 16>}]} {
    %c0 = arith.constant 0 : index
    %c0_0 = arith.constant 0 : index
    %c0_1 = arith.constant 0 : index
    %0 = vector.load %arg1[%c0, %c0_0, %c0_1] : memref<1x8x34xbf16, #tpu.memory_space<vmem>>, vector<1x8x34xbf16>
    %1 = vector.shape_cast %0 : vector<1x8x34xbf16> to vector<8x34xbf16>
    %2 = arith.extf %1 : vector<8x34xbf16> to vector<8x34xf32>
    %3 = tpu.iota {dimensions = array<i32: 1>} : vector<1x34xi32>
    %c9_i32 = arith.constant 9 : i32
    %4 = vector.broadcast %c9_i32 : i32 to vector<1x34xi32>
    %5 = arith.cmpi sge, %3, %4 : vector<1x34xi32>
    %c25_i32 = arith.constant 25 : i32
    %6 = vector.broadcast %c25_i32 : i32 to vector<1x34xi32>
    %7 = arith.cmpi slt, %3, %6 : vector<1x34xi32>
    %8 = arith.andi %5, %7 : vector<1x34xi1>
    %cst = arith.constant 0.000000e+00 : f32
    %9 = vector.shape_cast %8 : vector<1x34xi1> to vector<1x34xi1>
    %10 = vector.broadcast %9 : vector<1x34xi1> to vector<8x34xi1>
    %11 = vector.broadcast %cst : f32 to vector<8x34xf32>
    %12 = arith.select %10, %2, %11 : vector<8x34xi1>, vector<8x34xf32>
    %13 = vector.extract_strided_slice %12 {offsets = [0, 0], sizes = [8, 28], strides = [1, 1]} : vector<8x34xf32> to vector<8x28xf32>
    %14 = vector.extract_strided_slice %12 {offsets = [0, 1], sizes = [8, 28], strides = [1, 1]} : vector<8x34xf32> to vector<8x28xf32>
    %15 = vector.extract_strided_slice %12 {offsets = [0, 2], sizes = [8, 28], strides = [1, 1]} : vector<8x34xf32> to vector<8x28xf32>
    %16 = vector.extract_strided_slice %12 {offsets = [0, 3], sizes = [8, 28], strides = [1, 1]} : vector<8x34xf32> to vector<8x28xf32>
    %17 = vector.extract_strided_slice %12 {offsets = [0, 4], sizes = [8, 28], strides = [1, 1]} : vector<8x34xf32> to vector<8x28xf32>
    %18 = vector.extract_strided_slice %12 {offsets = [0, 5], sizes = [8, 28], strides = [1, 1]} : vector<8x34xf32> to vector<8x28xf32>
    %19 = vector.extract_strided_slice %12 {offsets = [0, 6], sizes = [8, 28], strides = [1, 1]} : vector<8x34xf32> to vector<8x28xf32>
    %20 = tpu.concatenate %13, %14, %15, %16, %17, %18, %19 in 0 : vector<8x28xf32>, vector<8x28xf32>, vector<8x28xf32>, vector<8x28xf32>, vector<8x28xf32>, vector<8x28xf32>, vector<8x28xf32> -> vector<56x28xf32>
    %c0_2 = arith.constant 0 : index
    %c0_3 = arith.constant 0 : index
    %21 = vector.load %arg2[%c0_2, %c0_3] : memref<32x56xbf16, #tpu.memory_space<vmem>>, vector<32x56xbf16>
    %22 = arith.truncf %20 : vector<56x28xf32> to vector<56x28xbf16>
    %cst_4 = arith.constant dense<0.000000e+00> : vector<32x28xf32>
    %23 = tpu.matmul %21, %22, %cst_4 {dimension_numbers = #tpu.dot_dimension_numbers<[1], [0], [0], [1], [0, 0, 1, 1], [], []>} : vector<32x56xbf16>, vector<56x28xbf16>, vector<32x28xf32> -> vector<32x28xf32>
    %c0_5 = arith.constant 0 : index
    %c0_6 = arith.constant 0 : index
    %c0_7 = arith.constant 0 : index
    %24 = vector.load %arg4[%c0_5, %c0_6, %c0_7] : memref<3x32x1xf32, #tpu.memory_space<vmem>>, vector<1x32x1xf32>
    %25 = vector.shape_cast %24 : vector<1x32x1xf32> to vector<32x1xf32>
    %26 = vector.broadcast %25 : vector<32x1xf32> to vector<32x28xf32>
    %27 = arith.addf %23, %26 : vector<32x28xf32>
    %cst_8 = arith.constant 0.000000e+00 : f32
    %28 = vector.broadcast %cst_8 : f32 to vector<32x28xf32>
    %29 = arith.cmpf oge, %27, %28 : vector<32x28xf32>
    %cst_9 = arith.constant 3.000000e-01 : f32
    %30 = vector.broadcast %cst_9 : f32 to vector<32x28xf32>
    %31 = arith.mulf %30, %27 : vector<32x28xf32>
    %32 = arith.select %29, %27, %31 : vector<32x28xi1>, vector<32x28xf32>
    %33 = tpu.iota {dimensions = array<i32: 1>} : vector<1x28xi32>
    %c6_i32 = arith.constant 6 : i32
    %34 = vector.broadcast %c6_i32 : i32 to vector<1x28xi32>
    %35 = arith.cmpi sge, %33, %34 : vector<1x28xi32>
    %c22_i32 = arith.constant 22 : i32
    %36 = vector.broadcast %c22_i32 : i32 to vector<1x28xi32>
    %37 = arith.cmpi slt, %33, %36 : vector<1x28xi32>
    %38 = arith.andi %35, %37 : vector<1x28xi1>
    %cst_10 = arith.constant 0.000000e+00 : f32
    %39 = vector.shape_cast %38 : vector<1x28xi1> to vector<1x28xi1>
    %40 = vector.broadcast %39 : vector<1x28xi1> to vector<32x28xi1>
    %41 = vector.broadcast %cst_10 : f32 to vector<32x28xf32>
    %42 = arith.select %40, %32, %41 : vector<32x28xi1>, vector<32x28xf32>
    %43 = vector.extract_strided_slice %42 {offsets = [0, 0], sizes = [32, 22], strides = [1, 1]} : vector<32x28xf32> to vector<32x22xf32>
    %44 = vector.extract_strided_slice %42 {offsets = [0, 1], sizes = [32, 22], strides = [1, 1]} : vector<32x28xf32> to vector<32x22xf32>
    %45 = vector.extract_strided_slice %42 {offsets = [0, 2], sizes = [32, 22], strides = [1, 1]} : vector<32x28xf32> to vector<32x22xf32>
    %46 = vector.extract_strided_slice %42 {offsets = [0, 3], sizes = [32, 22], strides = [1, 1]} : vector<32x28xf32> to vector<32x22xf32>
    %47 = vector.extract_strided_slice %42 {offsets = [0, 4], sizes = [32, 22], strides = [1, 1]} : vector<32x28xf32> to vector<32x22xf32>
    %48 = vector.extract_strided_slice %42 {offsets = [0, 5], sizes = [32, 22], strides = [1, 1]} : vector<32x28xf32> to vector<32x22xf32>
    %49 = vector.extract_strided_slice %42 {offsets = [0, 6], sizes = [32, 22], strides = [1, 1]} : vector<32x28xf32> to vector<32x22xf32>
    %50 = tpu.concatenate %43, %44, %45, %46, %47, %48, %49 in 0 : vector<32x22xf32>, vector<32x22xf32>, vector<32x22xf32>, vector<32x22xf32>, vector<32x22xf32>, vector<32x22xf32>, vector<32x22xf32> -> vector<224x22xf32>
    %c0_11 = arith.constant 0 : index
    %c0_12 = arith.constant 0 : index
    %c0_13 = arith.constant 0 : index
    %51 = vector.load %arg3[%c0_11, %c0_12, %c0_13] : memref<2x32x224xbf16, #tpu.memory_space<vmem>>, vector<1x32x224xbf16>
    %52 = vector.shape_cast %51 : vector<1x32x224xbf16> to vector<32x224xbf16>
    %53 = arith.truncf %50 : vector<224x22xf32> to vector<224x22xbf16>
    %cst_14 = arith.constant dense<0.000000e+00> : vector<32x22xf32>
    %54 = tpu.matmul %52, %53, %cst_14 {dimension_numbers = #tpu.dot_dimension_numbers<[1], [0], [0], [1], [0, 0, 1, 1], [], []>} : vector<32x224xbf16>, vector<224x22xbf16>, vector<32x22xf32> -> vector<32x22xf32>
    %c1 = arith.constant 1 : index
    %c0_15 = arith.constant 0 : index
    %c0_16 = arith.constant 0 : index
    %55 = vector.load %arg4[%c1, %c0_15, %c0_16] : memref<3x32x1xf32, #tpu.memory_space<vmem>>, vector<1x32x1xf32>
    %56 = vector.shape_cast %55 : vector<1x32x1xf32> to vector<32x1xf32>
    %57 = vector.broadcast %56 : vector<32x1xf32> to vector<32x22xf32>
    %58 = arith.addf %54, %57 : vector<32x22xf32>
    %cst_17 = arith.constant 0.000000e+00 : f32
    %59 = vector.broadcast %cst_17 : f32 to vector<32x22xf32>
    %60 = arith.cmpf oge, %58, %59 : vector<32x22xf32>
    %cst_18 = arith.constant 3.000000e-01 : f32
    %61 = vector.broadcast %cst_18 : f32 to vector<32x22xf32>
    %62 = arith.mulf %61, %58 : vector<32x22xf32>
    %63 = arith.select %60, %58, %62 : vector<32x22xi1>, vector<32x22xf32>
    %64 = tpu.iota {dimensions = array<i32: 1>} : vector<1x22xi32>
    %c3_i32 = arith.constant 3 : i32
    %65 = vector.broadcast %c3_i32 : i32 to vector<1x22xi32>
    %66 = arith.cmpi sge, %64, %65 : vector<1x22xi32>
    %c19_i32 = arith.constant 19 : i32
    %67 = vector.broadcast %c19_i32 : i32 to vector<1x22xi32>
    %68 = arith.cmpi slt, %64, %67 : vector<1x22xi32>
    %69 = arith.andi %66, %68 : vector<1x22xi1>
    %cst_19 = arith.constant 0.000000e+00 : f32
    %70 = vector.shape_cast %69 : vector<1x22xi1> to vector<1x22xi1>
    %71 = vector.broadcast %70 : vector<1x22xi1> to vector<32x22xi1>
    %72 = vector.broadcast %cst_19 : f32 to vector<32x22xf32>
    %73 = arith.select %71, %63, %72 : vector<32x22xi1>, vector<32x22xf32>
    %74 = vector.extract_strided_slice %73 {offsets = [0, 0], sizes = [32, 16], strides = [1, 1]} : vector<32x22xf32> to vector<32x16xf32>
    %75 = vector.extract_strided_slice %73 {offsets = [0, 1], sizes = [32, 16], strides = [1, 1]} : vector<32x22xf32> to vector<32x16xf32>
    %76 = vector.extract_strided_slice %73 {offsets = [0, 2], sizes = [32, 16], strides = [1, 1]} : vector<32x22xf32> to vector<32x16xf32>
    %77 = vector.extract_strided_slice %73 {offsets = [0, 3], sizes = [32, 16], strides = [1, 1]} : vector<32x22xf32> to vector<32x16xf32>
    %78 = vector.extract_strided_slice %73 {offsets = [0, 4], sizes = [32, 16], strides = [1, 1]} : vector<32x22xf32> to vector<32x16xf32>
    %79 = vector.extract_strided_slice %73 {offsets = [0, 5], sizes = [32, 16], strides = [1, 1]} : vector<32x22xf32> to vector<32x16xf32>
    %80 = vector.extract_strided_slice %73 {offsets = [0, 6], sizes = [32, 16], strides = [1, 1]} : vector<32x22xf32> to vector<32x16xf32>
    %81 = tpu.concatenate %74, %75, %76, %77, %78, %79, %80 in 0 : vector<32x16xf32>, vector<32x16xf32>, vector<32x16xf32>, vector<32x16xf32>, vector<32x16xf32>, vector<32x16xf32>, vector<32x16xf32> -> vector<224x16xf32>
    %c1_20 = arith.constant 1 : index
    %c0_21 = arith.constant 0 : index
    %c0_22 = arith.constant 0 : index
    %82 = vector.load %arg3[%c1_20, %c0_21, %c0_22] : memref<2x32x224xbf16, #tpu.memory_space<vmem>>, vector<1x32x224xbf16>
    %83 = vector.shape_cast %82 : vector<1x32x224xbf16> to vector<32x224xbf16>
    %84 = arith.truncf %81 : vector<224x16xf32> to vector<224x16xbf16>
    %cst_23 = arith.constant dense<0.000000e+00> : vector<32x16xf32>
    %85 = tpu.matmul %83, %84, %cst_23 {dimension_numbers = #tpu.dot_dimension_numbers<[1], [0], [0], [1], [0, 0, 1, 1], [], []>} : vector<32x224xbf16>, vector<224x16xbf16>, vector<32x16xf32> -> vector<32x16xf32>
    %c2 = arith.constant 2 : index
    %c0_24 = arith.constant 0 : index
    %c0_25 = arith.constant 0 : index
    %86 = vector.load %arg4[%c2, %c0_24, %c0_25] : memref<3x32x1xf32, #tpu.memory_space<vmem>>, vector<1x32x1xf32>
    %87 = vector.shape_cast %86 : vector<1x32x1xf32> to vector<32x1xf32>
    %88 = vector.broadcast %87 : vector<32x1xf32> to vector<32x16xf32>
    %89 = arith.addf %85, %88 : vector<32x16xf32>
    %cst_26 = arith.constant 0.000000e+00 : f32
    %90 = vector.broadcast %cst_26 : f32 to vector<32x16xf32>
    %91 = arith.cmpf oge, %89, %90 : vector<32x16xf32>
    %cst_27 = arith.constant 3.000000e-01 : f32
    %92 = vector.broadcast %cst_27 : f32 to vector<32x16xf32>
    %93 = arith.mulf %92, %89 : vector<32x16xf32>
    %94 = arith.select %91, %89, %93 : vector<32x16xi1>, vector<32x16xf32>
    %95 = arith.truncf %94 : vector<32x16xf32> to vector<32x16xbf16>
    %c0_28 = arith.constant 0 : index
    %c0_29 = arith.constant 0 : index
    %c0_30 = arith.constant 0 : index
    %96 = vector.load %arg5[%c0_28, %c0_29, %c0_30] : memref<1x32x16xbf16, #tpu.memory_space<vmem>>, vector<1x32x16xbf16>
    %97 = vector.shape_cast %96 : vector<1x32x16xbf16> to vector<32x16xbf16>
    %98 = vector.shape_cast %95 : vector<32x16xbf16> to vector<1x32x16xbf16>
    tpu.vector_store %arg5[%c0_28, %c0_29, %c0_30], %98 {strides = array<i32>} : memref<1x32x16xbf16, #tpu.memory_space<vmem>>, vector<1x32x16xbf16>,
    return
  }
  func.func @transform_0(%arg0: i32) -> (i32, i32, i32) {
    %c0_i32 = arith.constant 0 : i32
    %c0_i32_0 = arith.constant 0 : i32
    %c0_i32_1 = arith.constant 0 : i32
    return %arg0, %c0_i32, %c0_i32_0 : i32, i32, i32
  }
  func.func @transform_1(%arg0: i32) -> (i32, i32) {
    %c0_i32 = arith.constant 0 : i32
    %c0_i32_0 = arith.constant 0 : i32
    %c0_i32_1 = arith.constant 0 : i32
    return %c0_i32, %c0_i32_0 : i32, i32
  }
  func.func @transform_2(%arg0: i32) -> (i32, i32, i32) {
    %c0_i32 = arith.constant 0 : i32
    %c0_i32_0 = arith.constant 0 : i32
    %c0_i32_1 = arith.constant 0 : i32
    %c0_i32_2 = arith.constant 0 : i32
    return %c0_i32, %c0_i32_0, %c0_i32_1 : i32, i32, i32
  }
  func.func @transform_3(%arg0: i32) -> (i32, i32, i32) {
    %c0_i32 = arith.constant 0 : i32
    %c0_i32_0 = arith.constant 0 : i32
    %c0_i32_1 = arith.constant 0 : i32
    %c0_i32_2 = arith.constant 0 : i32
    return %c0_i32, %c0_i32_0, %c0_i32_1 : i32, i32, i32
  }
  func.func @transform_4(%arg0: i32) -> (i32, i32, i32) {
    %c0_i32 = arith.constant 0 : i32
    %c0_i32_0 = arith.constant 0 : i32
    %c0_i32_1 = arith.constant 0 : i32
    return %arg0, %c0_i32, %c0_i32_0 : i32, i32, i32
  }
}

module attributes {stable_mosaic.version = 11 : i64} {
  func.func @_conv_stack_kernel(%arg0: i32, %arg1: memref<1x8x12xbf16, #tpu.memory_space<vmem>>, %arg2: memref<32x24xbf16, #tpu.memory_space<vmem>>, %arg3: memref<1x32x96xbf16, #tpu.memory_space<vmem>>, %arg4: memref<2x32x1xf32, #tpu.memory_space<vmem>>, %arg5: memref<1x32x8xbf16, #tpu.memory_space<vmem>>) attributes {dimension_semantics = [#tpu.dimension_semantics<parallel>], iteration_bounds = array<i64: 2>, scalar_prefetch = 0 : i64, scratch_operands = 0 : i64, tpu.core_type = #tpu.core_type<tc>, window_params = [{transform_indices = @transform_0, window_bounds = array<i64: 1, 8, 12>}, {pipeline_mode = #tpu.pipeline_mode<synchronous>, transform_indices = @transform_1, window_bounds = array<i64: 32, 24>}, {pipeline_mode = #tpu.pipeline_mode<synchronous>, transform_indices = @transform_2, window_bounds = array<i64: 1, 32, 96>}, {pipeline_mode = #tpu.pipeline_mode<synchronous>, transform_indices = @transform_3, window_bounds = array<i64: 2, 32, 1>}, {transform_indices = @transform_4, window_bounds = array<i64: 1, 32, 8>}]} {
    %c0 = arith.constant 0 : index
    %c0_0 = arith.constant 0 : index
    %c0_1 = arith.constant 0 : index
    %0 = vector.load %arg1[%c0, %c0_0, %c0_1] : memref<1x8x12xbf16, #tpu.memory_space<vmem>>, vector<1x8x12xbf16>
    %1 = vector.shape_cast %0 : vector<1x8x12xbf16> to vector<8x12xbf16>
    %2 = arith.extf %1 : vector<8x12xbf16> to vector<8x12xf32>
    %3 = tpu.iota {dimensions = array<i32: 1>} : vector<1x12xi32>
    %c2_i32 = arith.constant 2 : i32
    %4 = vector.broadcast %c2_i32 : i32 to vector<1x12xi32>
    %5 = arith.cmpi sge, %3, %4 : vector<1x12xi32>
    %c10_i32 = arith.constant 10 : i32
    %6 = vector.broadcast %c10_i32 : i32 to vector<1x12xi32>
    %7 = arith.cmpi slt, %3, %6 : vector<1x12xi32>
    %8 = arith.andi %5, %7 : vector<1x12xi1>
    %cst = arith.constant 0.000000e+00 : f32
    %9 = vector.shape_cast %8 : vector<1x12xi1> to vector<1x12xi1>
    %10 = vector.broadcast %9 : vector<1x12xi1> to vector<8x12xi1>
    %11 = vector.broadcast %cst : f32 to vector<8x12xf32>
    %12 = arith.select %10, %2, %11 : vector<8x12xi1>, vector<8x12xf32>
    %13 = vector.extract_strided_slice %12 {offsets = [0, 0], sizes = [8, 10], strides = [1, 1]} : vector<8x12xf32> to vector<8x10xf32>
    %14 = vector.extract_strided_slice %12 {offsets = [0, 1], sizes = [8, 10], strides = [1, 1]} : vector<8x12xf32> to vector<8x10xf32>
    %15 = vector.extract_strided_slice %12 {offsets = [0, 2], sizes = [8, 10], strides = [1, 1]} : vector<8x12xf32> to vector<8x10xf32>
    %16 = tpu.concatenate %13, %14, %15 in 0 : vector<8x10xf32>, vector<8x10xf32>, vector<8x10xf32> -> vector<24x10xf32>
    %c0_2 = arith.constant 0 : index
    %c0_3 = arith.constant 0 : index
    %17 = vector.load %arg2[%c0_2, %c0_3] : memref<32x24xbf16, #tpu.memory_space<vmem>>, vector<32x24xbf16>
    %18 = arith.truncf %16 : vector<24x10xf32> to vector<24x10xbf16>
    %cst_4 = arith.constant dense<0.000000e+00> : vector<32x10xf32>
    %19 = tpu.matmul %17, %18, %cst_4 {dimension_numbers = #tpu.dot_dimension_numbers<[1], [0], [0], [1], [0, 0, 1, 1], [], []>} : vector<32x24xbf16>, vector<24x10xbf16>, vector<32x10xf32> -> vector<32x10xf32>
    %c0_5 = arith.constant 0 : index
    %c0_6 = arith.constant 0 : index
    %c0_7 = arith.constant 0 : index
    %20 = vector.load %arg4[%c0_5, %c0_6, %c0_7] : memref<2x32x1xf32, #tpu.memory_space<vmem>>, vector<1x32x1xf32>
    %21 = vector.shape_cast %20 : vector<1x32x1xf32> to vector<32x1xf32>
    %22 = vector.broadcast %21 : vector<32x1xf32> to vector<32x10xf32>
    %23 = arith.addf %19, %22 : vector<32x10xf32>
    %cst_8 = arith.constant 0.000000e+00 : f32
    %24 = vector.broadcast %cst_8 : f32 to vector<32x10xf32>
    %25 = arith.cmpf oge, %23, %24 : vector<32x10xf32>
    %cst_9 = arith.constant 3.000000e-01 : f32
    %26 = vector.broadcast %cst_9 : f32 to vector<32x10xf32>
    %27 = arith.mulf %26, %23 : vector<32x10xf32>
    %28 = arith.select %25, %23, %27 : vector<32x10xi1>, vector<32x10xf32>
    %29 = tpu.iota {dimensions = array<i32: 1>} : vector<1x10xi32>
    %c1_i32 = arith.constant 1 : i32
    %30 = vector.broadcast %c1_i32 : i32 to vector<1x10xi32>
    %31 = arith.cmpi sge, %29, %30 : vector<1x10xi32>
    %c9_i32 = arith.constant 9 : i32
    %32 = vector.broadcast %c9_i32 : i32 to vector<1x10xi32>
    %33 = arith.cmpi slt, %29, %32 : vector<1x10xi32>
    %34 = arith.andi %31, %33 : vector<1x10xi1>
    %cst_10 = arith.constant 0.000000e+00 : f32
    %35 = vector.shape_cast %34 : vector<1x10xi1> to vector<1x10xi1>
    %36 = vector.broadcast %35 : vector<1x10xi1> to vector<32x10xi1>
    %37 = vector.broadcast %cst_10 : f32 to vector<32x10xf32>
    %38 = arith.select %36, %28, %37 : vector<32x10xi1>, vector<32x10xf32>
    %39 = vector.extract_strided_slice %38 {offsets = [0, 0], sizes = [32, 8], strides = [1, 1]} : vector<32x10xf32> to vector<32x8xf32>
    %40 = vector.extract_strided_slice %38 {offsets = [0, 1], sizes = [32, 8], strides = [1, 1]} : vector<32x10xf32> to vector<32x8xf32>
    %41 = vector.extract_strided_slice %38 {offsets = [0, 2], sizes = [32, 8], strides = [1, 1]} : vector<32x10xf32> to vector<32x8xf32>
    %42 = tpu.concatenate %39, %40, %41 in 0 : vector<32x8xf32>, vector<32x8xf32>, vector<32x8xf32> -> vector<96x8xf32>
    %c0_11 = arith.constant 0 : index
    %c0_12 = arith.constant 0 : index
    %c0_13 = arith.constant 0 : index
    %43 = vector.load %arg3[%c0_11, %c0_12, %c0_13] : memref<1x32x96xbf16, #tpu.memory_space<vmem>>, vector<1x32x96xbf16>
    %44 = vector.shape_cast %43 : vector<1x32x96xbf16> to vector<32x96xbf16>
    %45 = arith.truncf %42 : vector<96x8xf32> to vector<96x8xbf16>
    %cst_14 = arith.constant dense<0.000000e+00> : vector<32x8xf32>
    %46 = tpu.matmul %44, %45, %cst_14 {dimension_numbers = #tpu.dot_dimension_numbers<[1], [0], [0], [1], [0, 0, 1, 1], [], []>} : vector<32x96xbf16>, vector<96x8xbf16>, vector<32x8xf32> -> vector<32x8xf32>
    %c1 = arith.constant 1 : index
    %c0_15 = arith.constant 0 : index
    %c0_16 = arith.constant 0 : index
    %47 = vector.load %arg4[%c1, %c0_15, %c0_16] : memref<2x32x1xf32, #tpu.memory_space<vmem>>, vector<1x32x1xf32>
    %48 = vector.shape_cast %47 : vector<1x32x1xf32> to vector<32x1xf32>
    %49 = vector.broadcast %48 : vector<32x1xf32> to vector<32x8xf32>
    %50 = arith.addf %46, %49 : vector<32x8xf32>
    %cst_17 = arith.constant 0.000000e+00 : f32
    %51 = vector.broadcast %cst_17 : f32 to vector<32x8xf32>
    %52 = arith.cmpf oge, %50, %51 : vector<32x8xf32>
    %cst_18 = arith.constant 3.000000e-01 : f32
    %53 = vector.broadcast %cst_18 : f32 to vector<32x8xf32>
    %54 = arith.mulf %53, %50 : vector<32x8xf32>
    %55 = arith.select %52, %50, %54 : vector<32x8xi1>, vector<32x8xf32>
    %56 = arith.truncf %55 : vector<32x8xf32> to vector<32x8xbf16>
    %c0_19 = arith.constant 0 : index
    %c0_20 = arith.constant 0 : index
    %c0_21 = arith.constant 0 : index
    %57 = vector.load %arg5[%c0_19, %c0_20, %c0_21] : memref<1x32x8xbf16, #tpu.memory_space<vmem>>, vector<1x32x8xbf16>
    %58 = vector.shape_cast %57 : vector<1x32x8xbf16> to vector<32x8xbf16>
    %59 = vector.shape_cast %56 : vector<32x8xbf16> to vector<1x32x8xbf16>
    tpu.vector_store %arg5[%c0_19, %c0_20, %c0_21], %59 {strides = array<i32>} : memref<1x32x8xbf16, #tpu.memory_space<vmem>>, vector<1x32x8xbf16>,
    return
  }
  func.func @transform_0(%arg0: i32) -> (i32, i32, i32) {
    %c0_i32 = arith.constant 0 : i32
    %c0_i32_0 = arith.constant 0 : i32
    %c0_i32_1 = arith.constant 0 : i32
    return %arg0, %c0_i32, %c0_i32_0 : i32, i32, i32
  }
  func.func @transform_1(%arg0: i32) -> (i32, i32) {
    %c0_i32 = arith.constant 0 : i32
    %c0_i32_0 = arith.constant 0 : i32
    %c0_i32_1 = arith.constant 0 : i32
    return %c0_i32, %c0_i32_0 : i32, i32
  }
  func.func @transform_2(%arg0: i32) -> (i32, i32, i32) {
    %c0_i32 = arith.constant 0 : i32
    %c0_i32_0 = arith.constant 0 : i32
    %c0_i32_1 = arith.constant 0 : i32
    %c0_i32_2 = arith.constant 0 : i32
    return %c0_i32, %c0_i32_0, %c0_i32_1 : i32, i32, i32
  }
  func.func @transform_3(%arg0: i32) -> (i32, i32, i32) {
    %c0_i32 = arith.constant 0 : i32
    %c0_i32_0 = arith.constant 0 : i32
    %c0_i32_1 = arith.constant 0 : i32
    %c0_i32_2 = arith.constant 0 : i32
    return %c0_i32, %c0_i32_0, %c0_i32_1 : i32, i32, i32
  }
  func.func @transform_4(%arg0: i32) -> (i32, i32, i32) {
    %c0_i32 = arith.constant 0 : i32
    %c0_i32_0 = arith.constant 0 : i32
    %c0_i32_1 = arith.constant 0 : i32
    return %arg0, %c0_i32, %c0_i32_0 : i32, i32, i32
  }
}

module attributes {stable_mosaic.version = 11 : i64} {
  func.func @_attn_kernel(%arg0: i32, %arg1: i32, %arg2: memref<1x16x32xbf16, #tpu.memory_space<vmem>>, %arg3: memref<1x32x8xbf16, #tpu.memory_space<vmem>>, %arg4: memref<1x1x8xf32, #tpu.memory_space<vmem>>, %arg5: memref<1x16x8xf32, #tpu.memory_space<vmem>>, %arg6: memref<1x16x8xf32, #tpu.memory_space<vmem>>, %arg7: memref<1x16x8xf32, #tpu.memory_space<vmem>>) attributes {dimension_semantics = [#tpu.dimension_semantics<parallel>, #tpu.dimension_semantics<parallel>], iteration_bounds = array<i64: 2, 1>, scalar_prefetch = 0 : i64, scratch_operands = 0 : i64, tpu.core_type = #tpu.core_type<tc>, window_params = [{transform_indices = @transform_0, window_bounds = array<i64: 1, 16, 32>}, {transform_indices = @transform_1, window_bounds = array<i64: 1, 32, 8>}, {transform_indices = @transform_2, window_bounds = array<i64: 1, 1, 8>}, {transform_indices = @transform_3, window_bounds = array<i64: 1, 16, 8>}, {transform_indices = @transform_4, window_bounds = array<i64: 1, 16, 8>}, {transform_indices = @transform_5, window_bounds = array<i64: 1, 16, 8>}]} {
    %c0 = arith.constant 0 : index
    %c0_0 = arith.constant 0 : index
    %c0_1 = arith.constant 0 : index
    %0 = vector.load %arg2[%c0, %c0_0, %c0_1] : memref<1x16x32xbf16, #tpu.memory_space<vmem>>, vector<1x16x32xbf16>
    %1 = vector.shape_cast %0 : vector<1x16x32xbf16> to vector<16x32xbf16>
    %c0_2 = arith.constant 0 : index
    %c0_3 = arith.constant 0 : index
    %c0_4 = arith.constant 0 : index
    %2 = vector.load %arg3[%c0_2, %c0_3, %c0_4] : memref<1x32x8xbf16, #tpu.memory_space<vmem>>, vector<1x32x8xbf16>
    %3 = vector.shape_cast %2 : vector<1x32x8xbf16> to vector<32x8xbf16>
    %c0_5 = arith.constant 0 : index
    %c0_6 = arith.constant 0 : index
    %c0_7 = arith.constant 0 : index
    %4 = vector.load %arg4[%c0_5, %c0_6, %c0_7] : memref<1x1x8xf32, #tpu.memory_space<vmem>>, vector<1x1x8xf32>
    %5 = vector.shape_cast %4 : vector<1x1x8xf32> to vector<1x8xf32>
    %cst = arith.constant dense<0.000000e+00> : vector<16x8xf32>
    %6 = tpu.matmul %1, %3, %cst {dimension_numbers = #tpu.dot_dimension_numbers<[1], [0], [0], [1], [0, 0, 1, 1], [], []>} : vector<16x32xbf16>, vector<32x8xbf16>, vector<16x8xf32> -> vector<16x8xf32>
    %cst_8 = arith.constant 2.000000e+00 : f32
    %7 = vector.broadcast %cst_8 : f32 to vector<16x8xf32>
    %8 = arith.mulf %7, %6 : vector<16x8xf32>
    %9 = vector.broadcast %5 : vector<1x8xf32> to vector<16x8xf32>
    %10 = arith.subf %8, %9 : vector<16x8xf32>
    %cst_9 = arith.constant 5.000000e-04 : f32
    %11 = vector.broadcast %cst_9 : f32 to vector<16x8xf32>
    %12 = arith.mulf %11, %10 : vector<16x8xf32>
    %cst_10 = arith.constant dense<0xFF800000> : vector<16xf32>
    %13 = vector.multi_reduction <maximumf>, %12, %cst_10 [1] : vector<16x8xf32> to vector<16xf32>
    %14 = vector.shape_cast %13 : vector<16xf32> to vector<16x1xf32>
    %15 = vector.broadcast %14 : vector<16x1xf32> to vector<16x8xf32>
    %16 = arith.subf %12, %15 : vector<16x8xf32>
    %17 = math.exp %16 : vector<16x8xf32>
    %cst_11 = arith.constant dense<0.000000e+00> : vector<16xf32>
    %18 = vector.multi_reduction <add>, %17, %cst_11 [1] : vector<16x8xf32> to vector<16xf32>
    %19 = vector.shape_cast %18 : vector<16xf32> to vector<16x1xf32>
    %c0_12 = arith.constant 0 : index
    %c0_13 = arith.constant 0 : index
    %c0_14 = arith.constant 0 : index
    %20 = vector.load %arg5[%c0_12, %c0_13, %c0_14] : memref<1x16x8xf32, #tpu.memory_space<vmem>>, vector<1x16x8xf32>
    %21 = vector.shape_cast %20 : vector<1x16x8xf32> to vector<16x8xf32>
    %cst_15 = arith.constant 9.99999993E-9 : f32
    %22 = vector.broadcast %cst_15 : f32 to vector<16x8xf32>
    %23 = arith.addf %21, %22 : vector<16x8xf32>
    %24 = math.log %19 : vector<16x1xf32>
    %25 = arith.addf %14, %24 : vector<16x1xf32>
    %26 = vector.broadcast %25 : vector<16x1xf32> to vector<16x8xf32>
    %27 = arith.subf %12, %26 : vector<16x8xf32>
    %28 = math.log %23 : vector<16x8xf32>
    %29 = arith.addf %27, %28 : vector<16x8xf32>
    %c0_16 = arith.constant 0 : index
    %c0_17 = arith.constant 0 : index
    %c0_18 = arith.constant 0 : index
    %30 = vector.load %arg6[%c0_16, %c0_17, %c0_18] : memref<1x16x8xf32, #tpu.memory_space<vmem>>, vector<1x16x8xf32>
    %31 = vector.shape_cast %30 : vector<1x16x8xf32> to vector<16x8xf32>
    %32 = vector.shape_cast %29 : vector<16x8xf32> to vector<1x16x8xf32>
    tpu.vector_store %arg6[%c0_16, %c0_17, %c0_18], %32 {strides = array<i32>} : memref<1x16x8xf32, #tpu.memory_space<vmem>>, vector<1x16x8xf32>,
    %33 = arith.mulf %17, %23 : vector<16x8xf32>
    %cst_19 = arith.constant dense<0.000000e+00> : vector<16xf32>
    %34 = vector.multi_reduction <add>, %33, %cst_19 [1] : vector<16x8xf32> to vector<16xf32>
    %35 = vector.shape_cast %34 : vector<16xf32> to vector<16x1xf32>
    %36 = vector.broadcast %35 : vector<16x1xf32> to vector<16x8xf32>
    %37 = arith.divf %33, %36 : vector<16x8xf32>
    %c0_20 = arith.constant 0 : index
    %c0_21 = arith.constant 0 : index
    %c0_22 = arith.constant 0 : index
    %38 = vector.load %arg7[%c0_20, %c0_21, %c0_22] : memref<1x16x8xf32, #tpu.memory_space<vmem>>, vector<1x16x8xf32>
    %39 = vector.shape_cast %38 : vector<1x16x8xf32> to vector<16x8xf32>
    %40 = vector.shape_cast %37 : vector<16x8xf32> to vector<1x16x8xf32>
    tpu.vector_store %arg7[%c0_20, %c0_21, %c0_22], %40 {strides = array<i32>} : memref<1x16x8xf32, #tpu.memory_space<vmem>>, vector<1x16x8xf32>,
    return
  }
  func.func @transform_0(%arg0: i32, %arg1: i32) -> (i32, i32, i32) {
    %c0_i32 = arith.constant 0 : i32
    %c0_i32_0 = arith.constant 0 : i32
    return %arg0, %arg1, %c0_i32 : i32, i32, i32
  }
  func.func @transform_1(%arg0: i32, %arg1: i32) -> (i32, i32, i32) {
    %c0_i32 = arith.constant 0 : i32
    %c0_i32_0 = arith.constant 0 : i32
    %c0_i32_1 = arith.constant 0 : i32
    return %arg0, %c0_i32, %c0_i32_0 : i32, i32, i32
  }
  func.func @transform_2(%arg0: i32, %arg1: i32) -> (i32, i32, i32) {
    %c0_i32 = arith.constant 0 : i32
    %c0_i32_0 = arith.constant 0 : i32
    %c0_i32_1 = arith.constant 0 : i32
    return %arg0, %c0_i32, %c0_i32_0 : i32, i32, i32
  }
  func.func @transform_3(%arg0: i32, %arg1: i32) -> (i32, i32, i32) {
    %c0_i32 = arith.constant 0 : i32
    %c0_i32_0 = arith.constant 0 : i32
    return %arg0, %arg1, %c0_i32 : i32, i32, i32
  }
  func.func @transform_4(%arg0: i32, %arg1: i32) -> (i32, i32, i32) {
    %c0_i32 = arith.constant 0 : i32
    %c0_i32_0 = arith.constant 0 : i32
    return %arg0, %arg1, %c0_i32 : i32, i32, i32
  }
  func.func @transform_5(%arg0: i32, %arg1: i32) -> (i32, i32, i32) {
    %c0_i32 = arith.constant 0 : i32
    %c0_i32_0 = arith.constant 0 : i32
    return %arg0, %arg1, %c0_i32 : i32, i32, i32
  }
}

</mosaic_0001>

<llo_original>
// kernel: custom-call.3
$region0: #{custom-call.3}
  %s0 = inlined_call_operand.vmem [shape: f32[16,2,8], index: 0, kind: output, shape index: {}]

// kernel: custom-call.4
$region0: #{custom-call.4}
  %s0 = inlined_call_operand.vmem [shape: s32[15,2,8], index: 0, kind: output, shape index: {}]

// kernel: aligner_forward.5
$region0: #{aligner_forward.5}
  #allocation0 [shape = 'u32[]', space=smem, size = 0x4, offset = 0x4, fixed_abs, tag = 'smem constant byte address 0x4 - core index']
  #allocation1 [shape = 'u32[144,128]{1,0:T(1,128)}', space=vmem, size = 0x12000, scoped, tag = 'internal scratch']
  %s0 = inlined_call_operand.vmem [shape: bf16[2,16,32], index: 0, kind: input, shape index: {}]
  %s1 = inlined_call_operand.vmem [shape: bf16[2,32,8], index: 1, kind: input, shape index: {}]
  %s2 = inlined_call_operand.vmem [shape: f32[2,1,8], index: 2, kind: input, shape index: {}]
  %s3 = inlined_call_operand.vmem [shape: f32[2,16,8], index: 3, kind: input, shape index: {}]
  %s4 = inlined_call_operand.vmem [shape: f32[2,16,8], index: 4, kind: output, shape index: {0}]
  %s5 = inlined_call_operand.vmem [shape: f32[2,16,8], index: 5, kind: output, shape index: {1}]
  %6 = xla_tuple %s4, %s5
  %s7 = sld [smem:[#allocation0]]
  $region57: #{aligner_forward.5} parent=0
    _
  %s9 = ssub.s32 1, %s7
  %s10 = scalar_select 0, %s9, %s7
  loop: start=0, step=1, limit=4
  $region2: #{aligner_forward.5} parent=0 // loop_pre_header
    _
  $region3: #{aligner_forward.5} parent=0 // loop_header
    %s12 = sphi 0, %s16
    %p13 = scmp.ge.s32.totalorder %s12, 4
    %s19 = sphi 0, %s31
    %s20 = sphi 0, %s27
    %s21 = sphi 0, %s19
    %s22 = sphi 0, %s20
    %s23 = sphi 0, %s21
    %s24 = sphi 0, %s22
    %s36 = sphi 0, %s38
    %s39 = sphi 0, %s36
    %s40 = sphi 0, %s39
    %s56 = sphi 0, %s40
    %s62 = sphi 0, %s64
    %s65 = sphi 0, %s62
    %s66 = sphi 0, %s65
    %s82 = sphi 0, %s66
    %s88 = sphi 0, %s90
    %s91 = sphi 0, %s88
    %s92 = sphi 0, %s91
    %s108 = sphi 0, %s92
    %s116 = sphi 0, %s118
    %s119 = sphi 0, %s116
    %s120 = sphi 0, %s119
    %s136 = sphi 0, %s120
    %s144 = sphi 0, %s146
    %s147 = sphi 0, %s144
    %s148 = sphi 0, %s147
    %s164 = sphi 0, %s148
    %s172 = sphi 0, %s174
    %s175 = sphi 0, %s172
    %s176 = sphi 0, %s175
    %s192 = sphi 0, %s176
  $region4: #{aligner_forward.5} parent=0 // loop_header_branch
    %15 = sbr.rel (%p13) target = $region8
  $region5: #{aligner_forward.5} parent=0 // loop_body
    %s17 = ssub.s32 %s12, 1
    %s18 = ssub.s32 %s12, 2
    %s25 = sadd.s32 1, %s20
    %p26 = scmp.ge.s32.totalorder %s25, 1
    %s27 = scalar_select %p26, 0, %s25
    %s28 = sadd.s32 1, %s19
    %s29 = scalar_select %p26, %s28, %s19
    %p30 = scmp.ge.s32.totalorder %s29, 2
    %s31 = scalar_select %p30, 0, %s29
    %s32 = ssub.s32 %s19, %s31
    %s33 = ssub.s32 %s20, %s27
    %s34 = sor.u32 %s32, %s33
    %p35 = scmp.eq.s32.totalorder %s34, 0
    %s37 = sadd.s32 %s36, 1
    %s38 = scalar_select %p35, %s36, %s37
    %p41 = pneg %p35
    %p42 = scmp.eq.s32.totalorder %s12, 1
    %p43 = por %p41, %p42
    %p44 = scmp.ne.s32.totalorder %s36, %s39
    %p45 = scmp.eq.s32.totalorder %s12, 0
    %p46 = por %p44, %p45
    %p47 = scmp.ne.s32.totalorder %s36, %s39
    %p48 = scmp.eq.s32.totalorder %s17, 1
    %p49 = por %p47, %p48
    %p50 = scmp.ne.s32.totalorder %s39, %s40
    %p51 = scmp.eq.s32.totalorder %s17, 0
    %p52 = por %p50, %p51
    %p53 = scmp.ne.s32.totalorder %s39, %s40
    %p54 = scmp.eq.s32.totalorder %s18, 1
    %p55 = por %p53, %p54
    %p57 = scmp.ne.s32.totalorder %s40, %s56
    %p58 = scmp.eq.s32.totalorder %s18, 0
    %p59 = por %p57, %p58
    %s60 = ssub.s32 %s19, %s31
    %p61 = scmp.eq.s32.totalorder %s60, 0
    %s63 = sadd.s32 %s62, 1
    %s64 = scalar_select %p61, %s62, %s63
    %p67 = pneg %p61
    %p68 = scmp.eq.s32.totalorder %s12, 1
    %p69 = por %p67, %p68
    %p70 = scmp.ne.s32.totalorder %s62, %s65
    %p71 = scmp.eq.s32.totalorder %s12, 0
    %p72 = por %p70, %p71
    %p73 = scmp.ne.s32.totalorder %s62, %s65
    %p74 = scmp.eq.s32.totalorder %s17, 1
    %p75 = por %p73, %p74
    %p76 = scmp.ne.s32.totalorder %s65, %s66
    %p77 = scmp.eq.s32.totalorder %s17, 0
    %p78 = por %p76, %p77
    %p79 = scmp.ne.s32.totalorder %s65, %s66
    %p80 = scmp.eq.s32.totalorder %s18, 1
    %p81 = por %p79, %p80
    %p83 = scmp.ne.s32.totalorder %s66, %s82
    %p84 = scmp.eq.s32.totalorder %s18, 0
    %p85 = por %p83, %p84
    %s86 = ssub.s32 %s19, %s31
    %p87 = scmp.eq.s32.totalorder %s86, 0
    %s89 = sadd.s32 %s88, 1
    %s90 = scalar_select %p87, %s88, %s89
    %p93 = pneg %p87
    %p94 = scmp.eq.s32.totalorder %s12, 1
    %p95 = por %p93, %p94
    %p96 = scmp.ne.s32.totalorder %s88, %s91
    %p97 = scmp.eq.s32.totalorder %s12, 0
    %p98 = por %p96, %p97
    %p99 = scmp.ne.s32.totalorder %s88, %s91
    %p100 = scmp.eq.s32.totalorder %s17, 1
    %p101 = por %p99, %p100
    %p102 = scmp.ne.s32.totalorder %s91, %s92
    %p103 = scmp.eq.s32.totalorder %s17, 0
    %p104 = por %p102, %p103
    %p105 = scmp.ne.s32.totalorder %s91, %s92
    %p106 = scmp.eq.s32.totalorder %s18, 1
    %p107 = por %p105, %p106
    %p109 = scmp.ne.s32.totalorder %s92, %s108
    %p110 = scmp.eq.s32.totalorder %s18, 0
    %p111 = por %p109, %p110
    %s112 = ssub.s32 %s19, %s31
    %s113 = ssub.s32 %s20, %s27
    %s114 = sor.u32 %s112, %s113
    %p115 = scmp.eq.s32.totalorder %s114, 0
    %s117 = sadd.s32 %s116, 1
    %s118 = scalar_select %p115, %s116, %s117
    %p121 = pneg %p115
    %p122 = scmp.eq.s32.totalorder %s12, 1
    %p123 = por %p121, %p122
    %p124 = scmp.ne.s32.totalorder %s116, %s119
    %p125 = scmp.eq.s32.totalorder %s12, 0
    %p126 = por %p124, %p125
    %p127 = scmp.ne.s32.totalorder %s116, %s119
    %p128 = scmp.eq.s32.totalorder %s17, 1
    %p129 = por %p127, %p128
    %p130 = scmp.ne.s32.totalorder %s119, %s120
    %p131 = scmp.eq.s32.totalorder %s17, 0
    %p132 = por %p130, %p131
    %p133 = scmp.ne.s32.totalorder %s119, %s120
    %p134 = scmp.eq.s32.totalorder %s18, 1
    %p135 = por %p133, %p134
    %p137 = scmp.ne.s32.totalorder %s120, %s136
    %p138 = scmp.eq.s32.totalorder %s18, 0
    %p139 = por %p137, %p138
    %s140 = ssub.s32 %s19, %s31
    %s141 = ssub.s32 %s20, %s27
    %s142 = sor.u32 %s140, %s141
    %p143 = scmp.eq.s32.totalorder %s142, 0
    %s145 = sadd.s32 %s144, 1
    %s146 = scalar_select %p143, %s144, %s145
    %p149 = pneg %p143
    %p150 = scmp.eq.s32.totalorder %s12, 1
    %p151 = por %p149, %p150
    %p152 = scmp.ne.s32.totalorder %s144, %s147
    %p153 = scmp.eq.s32.totalorder %s12, 0
    %p154 = por %p152, %p153
    %p155 = scmp.ne.s32.totalorder %s144, %s147
    %p156 = scmp.eq.s32.totalorder %s17, 1
    %p157 = por %p155, %p156
    %p158 = scmp.ne.s32.totalorder %s147, %s148
    %p159 = scmp.eq.s32.totalorder %s17, 0
    %p160 = por %p158, %p159
    %p161 = scmp.ne.s32.totalorder %s147, %s148
    %p162 = scmp.eq.s32.totalorder %s18, 1
    %p163 = por %p161, %p162
    %p165 = scmp.ne.s32.totalorder %s148, %s164
    %p166 = scmp.eq.s32.totalorder %s18, 0
    %p167 = por %p165, %p166
    %s168 = ssub.s32 %s19, %s31
    %s169 = ssub.s32 %s20, %s27
    %s170 = sor.u32 %s168, %s169
    %p171 = scmp.eq.s32.totalorder %s170, 0
    %s173 = sadd.s32 %s172, 1
    %s174 = scalar_select %p171, %s172, %s173
    %p177 = pneg %p171
    %p178 = scmp.eq.s32.totalorder %s12, 1
    %p179 = por %p177, %p178
    %p180 = scmp.ne.s32.totalorder %s172, %s175
    %p181 = scmp.eq.s32.totalorder %s12, 0
    %p182 = por %p180, %p181
    %p183 = scmp.ne.s32.totalorder %s172, %s175
    %p184 = scmp.eq.s32.totalorder %s17, 1
    %p185 = por %p183, %p184
    %p186 = scmp.ne.s32.totalorder %s175, %s176
    %p187 = scmp.eq.s32.totalorder %s17, 0
    %p188 = por %p186, %p187
    %p189 = scmp.ne.s32.totalorder %s175, %s176
    %p190 = scmp.eq.s32.totalorder %s18, 1
    %p191 = por %p189, %p190
    %p193 = scmp.ne.s32.totalorder %s176, %s192
    %p194 = scmp.eq.s32.totalorder %s18, 0
    %p195 = por %p193, %p194
    %p196 = scmp.le.s32.totalorder 1, %s12
    %p197 = scmp.lt.s32.totalorder %s12, 3
    %p198 = pnand %p196, %p197
    %p199 = pneg %p198
    // Predicated region
    $region9: #{aligner_forward.5} parent=5 // pred_check
      _
    $region10: #{aligner_forward.5} parent=5 // pred_check_branch
      %201 = sbr.rel (%p198) target = $region12
    $region11: #{aligner_forward.5} parent=5 // pred_region
      %s202 = ssub.s32 %s12, 1
    $region12: #{aligner_forward.5} parent=5 // pred_fallthru
      _
    %p203 = scmp.lt.s32.totalorder %s12, 2
    // Predicated region
    $region13: #{aligner_forward.5} parent=5 // pred_check
      %p204 = pneg %p203
    $region14: #{aligner_forward.5} parent=5 // pred_check_branch
      %206 = sbr.rel (%p204) target = $region16
    $region15: #{aligner_forward.5} parent=5 // pred_region
      // Predicated region
      $region17: #{aligner_forward.5} parent=15 // pred_check
        %p207 = pneg %p46
      $region18: #{aligner_forward.5} parent=15 // pred_check_branch
        %209 = sbr.rel (%p207) target = $region20
      $region19: #{aligner_forward.5} parent=15 // pred_region
        %s210 = smul.u32 2, %s20
        %p211 = scmp.lt.s32.totalorder %s19, 1
        %s212 = scalar_select %p211, %s19, 1
        %p213 = scmp.lt.s32.totalorder %s210, 1
        %s214 = scalar_select %p213, %s210, 1
        %s215 = smul.addr %s212, 2
        %s216 = sadd.s32 %s214, %s215
        %s217 = smul.addr %s216, 4
        %s218 = scalar_lea.vmem %s0, %s217
        %s219 = smul.u32 2, %s20
      $region20: #{aligner_forward.5} parent=15 // pred_fallthru
        _
      // Predicated region
      $region21: #{aligner_forward.5} parent=15 // pred_check
        %p220 = pneg %p72
      $region22: #{aligner_forward.5} parent=15 // pred_check_branch
        %222 = sbr.rel (%p220) target = $region24
      $region23: #{aligner_forward.5} parent=15 // pred_region
        %p223 = scmp.lt.s32.totalorder %s19, 1
        %s224 = scalar_select %p223, %s19, 1
        %s225 = smul.addr %s224, 4
        %s226 = smul.addr %s225, 4
        %s227 = scalar_lea.vmem %s1, %s226
      $region24: #{aligner_forward.5} parent=15 // pred_fallthru
        _
      // Predicated region
      $region25: #{aligner_forward.5} parent=15 // pred_check
        %p228 = pneg %p98
      $region26: #{aligner_forward.5} parent=15 // pred_check_branch
        %230 = sbr.rel (%p228) target = $region28
      $region27: #{aligner_forward.5} parent=15 // pred_region
        %p231 = scmp.lt.s32.totalorder %s19, 1
        %s232 = scalar_select %p231, %s19, 1
        %s233 = scalar_lea.vmem %s2, %s232
      $region28: #{aligner_forward.5} parent=15 // pred_fallthru
        _
      // Predicated region
      $region29: #{aligner_forward.5} parent=15 // pred_check
        %p234 = pneg %p126
      $region30: #{aligner_forward.5} parent=15 // pred_check_branch
        %236 = sbr.rel (%p234) target = $region32
      $region31: #{aligner_forward.5} parent=15 // pred_region
        %s237 = smul.u32 2, %s20
        %p238 = scmp.lt.s32.totalorder %s19, 1
        %s239 = scalar_select %p238, %s19, 1
        %p240 = scmp.lt.s32.totalorder %s237, 1
        %s241 = scalar_select %p240, %s237, 1
        %s242 = smul.addr %s239, 2
        %s243 = sadd.s32 %s241, %s242
        %s244 = smul.addr %s243, 8
        %s245 = scalar_lea.vmem %s3, %s244
        %s246 = smul.u32 2, %s20
      $region32: #{aligner_forward.5} parent=15 // pred_fallthru
        _
    $region16: #{aligner_forward.5} parent=5 // pred_fallthru
      _
    %p247 = scmp.le.s32.totalorder 1, %s12
    %p248 = scmp.lt.s32.totalorder %s12, 3
    %p249 = pnand %p247, %p248
    %p250 = pneg %p249
    // Predicated region
    $region33: #{aligner_forward.5} parent=5 // pred_check
      _
    $region34: #{aligner_forward.5} parent=5 // pred_check_branch
      %252 = sbr.rel (%p249) target = $region36
    $region35: #{aligner_forward.5} parent=5 // pred_region
      %s253 = ssub.s32 %s12, 1
      %s254 = smul.u32 2, %s22
      %p255 = scmp.lt.s32.totalorder %s21, 1
      %s256 = scalar_select %p255, %s21, 1
      %p257 = scmp.lt.s32.totalorder %s254, 1
      %s258 = scalar_select %p257, %s254, 1
      %s259 = smul.addr %s256, 2
      %s260 = sadd.s32 %s258, %s259
      %s261 = smul.addr %s260, 4
      %s262 = scalar_lea.vmem %s0, %s261
      %p263 = pneg %p52
      %p264 = pneg %p49
      %p265 = scmp.lt.s32.totalorder %s21, 1
      %s266 = scalar_select %p265, %s21, 1
      %s267 = smul.addr %s266, 4
      %s268 = smul.addr %s267, 4
      %s269 = scalar_lea.vmem %s1, %s268
      %p270 = pneg %p78
      %p271 = pneg %p75
      %p272 = scmp.lt.s32.totalorder %s21, 1
      %s273 = scalar_select %p272, %s21, 1
      %s274 = scalar_lea.vmem %s2, %s273
      %p275 = pneg %p104
      %p276 = pneg %p101
      %s277 = smul.u32 2, %s22
      %p278 = scmp.lt.s32.totalorder %s21, 1
      %s279 = scalar_select %p278, %s21, 1
      %p280 = scmp.lt.s32.totalorder %s277, 1
      %s281 = scalar_select %p280, %s277, 1
      %s282 = smul.addr %s279, 2
      %s283 = sadd.s32 %s281, %s282
      %s284 = smul.addr %s283, 8
      %s285 = scalar_lea.vmem %s3, %s284
      %p286 = pneg %p132
      %p287 = pneg %p129
      %p288 = pneg %p160
      %p289 = pneg %p157
      %s290 = smul.u32 2, %s22
      %p291 = scmp.lt.s32.totalorder %s21, 1
      %s292 = scalar_select %p291, %s21, 1
      %p293 = scmp.lt.s32.totalorder %s290, 1
      %s294 = scalar_select %p293, %s290, 1
      %s295 = smul.addr %s292, 2
      %s296 = sadd.s32 %s294, %s295
      %s297 = smul.addr %s296, 8
      %s298 = scalar_lea.vmem %s4, %s297
      %p299 = pneg %p188
      %p300 = pneg %p185
      %s301 = smul.u32 2, %s22
      %p302 = scmp.lt.s32.totalorder %s21, 1
      %s303 = scalar_select %p302, %s21, 1
      %p304 = scmp.lt.s32.totalorder %s301, 1
      %s305 = scalar_select %p304, %s301, 1
      %s306 = smul.addr %s303, 2
      %s307 = sadd.s32 %s305, %s306
      %s308 = smul.addr %s307, 8
      %s309 = scalar_lea.vmem %s5, %s308
      %s310 = smul.u32 2, %s22
      %p311 = scmp.lt.s32.totalorder %s21, 1
      %s312 = scalar_select %p311, %s21, 1
      %p313 = scmp.lt.s32.totalorder %s310, 1
      %s314 = scalar_select %p313, %s310, 1
      %s315 = smul.addr %s312, 2
      %s316 = sadd.s32 %s314, %s315
      %s317 = smul.addr %s316, 4
      %s318 = scalar_lea.vmem %s0, %s317
      %s319 = smul.u32 2, %s22
      %p320 = scmp.lt.s32.totalorder %s21, 1
      %s321 = scalar_select %p320, %s21, 1
      %s322 = smul.addr %s321, 4
      %s323 = smul.addr %s322, 4
      %s324 = scalar_lea.vmem %s1, %s323
      %p325 = scmp.lt.s32.totalorder %s21, 1
      %s326 = scalar_select %p325, %s21, 1
      %s327 = scalar_lea.vmem %s2, %s326
      %s328 = smul.u32 2, %s22
      %p329 = scmp.lt.s32.totalorder %s21, 1
      %s330 = scalar_select %p329, %s21, 1
      %p331 = scmp.lt.s32.totalorder %s328, 1
      %s332 = scalar_select %p331, %s328, 1
      %s333 = smul.addr %s330, 2
      %s334 = sadd.s32 %s332, %s333
      %s335 = smul.addr %s334, 8
      %s336 = scalar_lea.vmem %s3, %s335
      %s337 = smul.u32 2, %s22
      %s338 = smul.u32 2, %s22
      %p339 = scmp.lt.s32.totalorder %s21, 1
      %s340 = scalar_select %p339, %s21, 1
      %p341 = scmp.lt.s32.totalorder %s338, 1
      %s342 = scalar_select %p341, %s338, 1
      %s343 = smul.addr %s340, 2
      %s344 = sadd.s32 %s342, %s343
      %s345 = smul.addr %s344, 8
      %s346 = scalar_lea.vmem %s4, %s345
      %s347 = smul.u32 2, %s22
      %s348 = smul.u32 2, %s22
      %p349 = scmp.lt.s32.totalorder %s21, 1
      %s350 = scalar_select %p349, %s21, 1
      %p351 = scmp.lt.s32.totalorder %s348, 1
      %s352 = scalar_select %p351, %s348, 1
      %s353 = smul.addr %s350, 2
      %s354 = sadd.s32 %s352, %s353
      %s355 = smul.addr %s354, 8
      %s356 = scalar_lea.vmem %s5, %s355
      %s357 = smul.u32 2, %s22
      %v359 = vld [vmem:[%s318] sm:$0xf]
      %v360 = vld [vmem:[%s318 + $0x4] sm:$0xf]
      %v361 = vld [vmem:[%s324] sm:$0xf]
      %v362 = vld [vmem:[%s324 + $0x4] sm:$0xf]
      %v363 = vld [vmem:[%s324 + $0x8] sm:$0xf]
      %v364 = vld [vmem:[%s324 + $0xc] sm:$0xf]
      %v365 = vld [vmem:[%s327] sm:$0x1]
      %v368 = vunpack.c.l.b16 %v359
      %v369 = vunpack.c.l.b16 %v360
      %v370 = vpack.c.b16 %v369, %v368
      %v375 = vunpack.c.l.b16 %v361
      %v376 = vunpack.c.l.b16 %v362
      %v377 = vunpack.c.l.b16 %v363
      %v378 = vunpack.c.l.b16 %v364
      %v379 = vpack.c.b16 %v376, %v375
      %v380 = vpack.c.b16 %v378, %v377
      %vm383 = vcmask 261120
      %v385 = vsel %vm383, %v370, 0
      %387 = vmatprep.subr.bf16.mxu0 0
      %388 = vmatpush1.bf16.msra.mxu0 0
      %389 = vmatprep.subr.bf16.mxu0 0
      %390 = vmatpush1.bf16.msra.mxu0 0
      %391 = vmatprep.subr.bf16.mxu0 0
      %392 = vmatpush1.bf16.msra.mxu0 0
      %393 = vmatprep.subr.bf16.mxu0 0
      %394 = vmatpush1.bf16.msra.mxu0 0
      %395 = vmatprep.subr.bf16.mxu0 0
      %396 = vmatpush1.bf16.msra.mxu0 0
      %397 = vmatprep.subr.bf16.mxu0 0
      %398 = vmatpush1.bf16.msra.mxu0 0
      %399 = vmatprep.subr.bf16.mxu0 0
      %400 = vmatpush1.bf16.msra.mxu0 %v380
      %401 = vmatprep.subr.bf16.mxu0 0
      %402 = vmatpush1.bf16.msra.mxu0 %v379
      %403 = vmatprep.subr.bf16.mxu0 0
      %404 = vmatpush2.bf16.msra.mxu0 0
      %405 = vmatprep.subr.bf16.mxu0 0
      %406 = vmatpush2.bf16.msra.mxu0 0
      %407 = vmatprep.subr.bf16.mxu0 0
      %408 = vmatpush2.bf16.msra.mxu0 0
      %409 = vmatprep.subr.bf16.mxu0 0
      %410 = vmatpush2.bf16.msra.mxu0 0
      %411 = vmatprep.subr.bf16.mxu0 0
      %412 = vmatpush2.bf16.msra.mxu0 0
      %413 = vmatprep.subr.bf16.mxu0 0
      %414 = vmatpush2.bf16.msra.mxu0 0
      %415 = vmatprep.subr.bf16.mxu0 0
      %416 = vmatpush2.bf16.msra.mxu0 0
      %417 = vmatprep.subr.bf16.mxu0 0
      %418 = vmatpush2.bf16.msra.mxu0 0
      %419 = vmatprep.mubr.bf16.mxu0 0
      %420 = vmatmul.mubr.bf16.gmra.mxu0 %v385
      %v421 = vpop.f32.mrf.mxu0
      %v422 = vadd.f32 0.0, %v421
      %v423 = vpop.f32.mrf.mxu0
      %v424 = vpop.f32.mrf.mxu0
      %v425 = vadd.f32 0.0, %v424
      %v426 = vpop.f32.mrf.mxu0
      %427 = vdwg.mxu0
      %v428 = vmul.f32 %v422, 2.0
      %v429 = vmul.f32 %v425, 2.0
      %v431 = vlaneseq
      %v432 = vshrl.u32 %v431, 7
      %v433 = vsub.s32 0, %v432
      %v434 = vrot.slane %v365, %v433
      %v436 = vsub.f32 %v428, %v434
      %v437 = vsub.f32 %v429, %v434
      %v438 = vmul.f32 %v436, 0.0005
      %v439 = vmul.f32 %v437, 0.0005
      %vm440 = vcmask 64512
      %v441 = vsel %vm440, %v438, -inf
      %442 = vmax.xlane.f32.xlu0 %v441
      %v443 = vpop.xlane.xlu0 %442
      %v444 = vsel %vm440, %v439, -inf
      %445 = vmax.xlane.f32.xlu0 %v444
      %v446 = vpop.xlane.xlu0 %445
      %v447 = vsub.f32 %v438, %v443
      %v448 = vsub.f32 %v439, %v446
      %v449 = vmul.f32 %v447, 1.442695
      %v450 = vpow.pop %v449
      %v451 = vmul.f32 %v448, 1.442695
      %v452 = vpow.pop %v451
      %v453 = vsel %vm440, %v450, 0.0
      %454 = vadd.xlane.f32.xlu0 %v453
      %v455 = vpop.xlane.xlu0 %454
      %v456 = vsel %vm440, %v452, 0.0
      %457 = vadd.xlane.f32.xlu0 %v456
      %v458 = vpop.xlane.xlu0 %457
      %v459 = vld [vmem:[%s336] sm:$0xff]
      %v460 = vld [vmem:[%s336 + $0x8] sm:$0xff]
      %v461 = vadd.f32 %v459, 1e-08
      %v462 = vadd.f32 %v460, 1e-08
      %v463 = vlog2.pop %v455
      %v464 = vmul.f32 %v463, 0.6931472
      %v465 = vlog2.pop %v458
      %v466 = vmul.f32 %v465, 0.6931472
      %v467 = vadd.f32 %v443, %v464
      %v468 = vadd.f32 %v446, %v466
      %v469 = vsub.f32 %v438, %v467
      %v470 = vsub.f32 %v439, %v468
      %v471 = vlog2.pop %v461
      %v472 = vmul.f32 %v471, 0.6931472
      %v473 = vlog2.pop %v462
      %v474 = vmul.f32 %v473, 0.6931472
      %v475 = vadd.f32 %v469, %v472
      %v476 = vadd.f32 %v470, %v474
      %477 = vst.msk [vmem:[%s346] sm:$0xff] %vm440, %v475
      %478 = vst.msk [vmem:[%s346 + $0x8] sm:$0xff] %vm440, %v476
      %v479 = vmul.f32 %v450, %v461
      %v480 = vmul.f32 %v452, %v462
      %v481 = vsel %vm440, %v479, 0.0
      %482 = vadd.xlane.f32.xlu0 %v481
      %v483 = vpop.xlane.xlu0 %482
      %v484 = vsel %vm440, %v480, 0.0
      %485 = vadd.xlane.f32.xlu0 %v484
      %v486 = vpop.xlane.xlu0 %485
      %v487 = vrcp.pop %v483
      %v488 = vmul.f32 %v479, %v487
      %v489 = vrcp.pop %v486
      %v490 = vmul.f32 %v480, %v489
      %491 = vst.msk [vmem:[%s356] sm:$0xff] %vm440, %v488
      %492 = vst.msk [vmem:[%s356 + $0x8] sm:$0xff] %vm440, %v490
      %s493 = smul.u32 2, %s22
      %p494 = scmp.lt.s32.totalorder %s21, 1
      %s495 = scalar_select %p494, %s21, 1
      %p496 = scmp.lt.s32.totalorder %s493, 1
      %s497 = scalar_select %p496, %s493, 1
      %s498 = smul.addr %s495, 2
      %s499 = sadd.s32 %s497, %s498
      %s500 = smul.addr %s499, 8
      %s501 = scalar_lea.vmem %s4, %s500
      %s502 = smul.u32 2, %s22
      %p503 = scmp.lt.s32.totalorder %s21, 1
      %s504 = scalar_select %p503, %s21, 1
      %p505 = scmp.lt.s32.totalorder %s502, 1
      %s506 = scalar_select %p505, %s502, 1
      %s507 = smul.addr %s504, 2
      %s508 = sadd.s32 %s506, %s507
      %s509 = smul.addr %s508, 8
      %s510 = scalar_lea.vmem %s5, %s509
      // Predicated region
      $region37: #{aligner_forward.5} parent=35 // pred_check
        %p511 = pneg %p157
      $region38: #{aligner_forward.5} parent=35 // pred_check_branch
        %513 = sbr.rel (%p511) target = $region40
      $region39: #{aligner_forward.5} parent=35 // pred_region
        %s514 = smul.u32 2, %s22
      $region40: #{aligner_forward.5} parent=35 // pred_fallthru
        _
      // Predicated region
      $region41: #{aligner_forward.5} parent=35 // pred_check
        %p515 = pneg %p185
      $region42: #{aligner_forward.5} parent=35 // pred_check_branch
        %517 = sbr.rel (%p515) target = $region44
      $region43: #{aligner_forward.5} parent=35 // pred_region
        %s518 = smul.u32 2, %s22
      $region44: #{aligner_forward.5} parent=35 // pred_fallthru
        _
    $region36: #{aligner_forward.5} parent=5 // pred_fallthru
      _
    %p519 = scmp.le.s32.totalorder 2, %s12
    // Predicated region
    $region45: #{aligner_forward.5} parent=5 // pred_check
      %p520 = pneg %p519
    $region46: #{aligner_forward.5} parent=5 // pred_check_branch
      %522 = sbr.rel (%p520) target = $region48
    $region47: #{aligner_forward.5} parent=5 // pred_region
      %s523 = ssub.s32 %s12, 2
      // Predicated region
      $region49: #{aligner_forward.5} parent=47 // pred_check
        %p524 = pneg %p163
      $region50: #{aligner_forward.5} parent=47 // pred_check_branch
        %526 = sbr.rel (%p524) target = $region52
      $region51: #{aligner_forward.5} parent=47 // pred_region
        %s527 = smul.u32 2, %s24
        %p528 = scmp.lt.s32.totalorder %s23, 1
        %s529 = scalar_select %p528, %s23, 1
        %p530 = scmp.lt.s32.totalorder %s527, 1
        %s531 = scalar_select %p530, %s527, 1
        %s532 = smul.addr %s529, 2
        %s533 = sadd.s32 %s531, %s532
        %s534 = smul.addr %s533, 8
        %s535 = scalar_lea.vmem %s4, %s534
      $region52: #{aligner_forward.5} parent=47 // pred_fallthru
        _
      // Predicated region
      $region53: #{aligner_forward.5} parent=47 // pred_check
        %p536 = pneg %p191
      $region54: #{aligner_forward.5} parent=47 // pred_check_branch
        %538 = sbr.rel (%p536) target = $region56
      $region55: #{aligner_forward.5} parent=47 // pred_region
        %s539 = smul.u32 2, %s24
        %p540 = scmp.lt.s32.totalorder %s23, 1
        %s541 = scalar_select %p540, %s23, 1
        %p542 = scmp.lt.s32.totalorder %s539, 1
        %s543 = scalar_select %p542, %s539, 1
        %s544 = smul.addr %s541, 2
        %s545 = sadd.s32 %s543, %s544
        %s546 = smul.addr %s545, 8
        %s547 = scalar_lea.vmem %s5, %s546
      $region56: #{aligner_forward.5} parent=47 // pred_fallthru
        _
    $region48: #{aligner_forward.5} parent=5 // pred_fallthru
      _
  $region6: #{aligner_forward.5} parent=0 // loop_footer
    %s16 = sadd.s32 1, %s12
  $region7: #{aligner_forward.5} parent=0 // loop_footer_branch
    %11 = sbr.rel target = $region3
  $region8: #{aligner_forward.5} parent=0 // loop_exit
    _

// kernel: aligner_forward.3
$region0: #{aligner_forward.3}
  #allocation0 [shape = 'u32[]', space=smem, size = 0x4, offset = 0x4, fixed_abs, tag = 'smem constant byte address 0x4 - core index']
  #allocation1 [shape = 'u32[144,128]{1,0:T(1,128)}', space=vmem, size = 0x12000, scoped, tag = 'internal scratch']
  %s0 = inlined_call_operand.vmem [shape: bf16[2,8,12], index: 0, kind: input, shape index: {}]
  %s1 = inlined_call_operand.vmem [shape: bf16[32,24], index: 1, kind: input, shape index: {}]
  %s2 = inlined_call_operand.vmem [shape: bf16[1,32,96], index: 2, kind: input, shape index: {}]
  %s3 = inlined_call_operand.vmem [shape: f32[2,32,1], index: 3, kind: input, shape index: {}]
  %s4 = inlined_call_operand.vmem [shape: bf16[2,32,8], index: 4, kind: output, shape index: {}]
  %s5 = sld [smem:[#allocation0]]
  $region49: #{aligner_forward.3} parent=0
    _
  %s7 = ssub.s32 1, %s5
  %s8 = scalar_select 0, %s7, %s5
  loop: start=0, step=1, limit=4
  $region2: #{aligner_forward.3} parent=0 // loop_pre_header
    _
  $region3: #{aligner_forward.3} parent=0 // loop_header
    %s10 = sphi 0, %s14
    %p11 = scmp.ge.s32.totalorder %s10, 4
    %s20 = sphi 0, %s22
    %s23 = sphi 0, %s20
    %s24 = sphi 0, %s23
    %s40 = sphi 0, %s24
    %s44 = sphi 0, %s44
    %s46 = sphi 0, %s44
    %s47 = sphi 0, %s46
    %s61 = sphi 0, %s47
    %s65 = sphi 0, %s65
    %s67 = sphi 0, %s65
    %s68 = sphi 0, %s67
    %s82 = sphi 0, %s68
    %s86 = sphi 0, %s86
    %s88 = sphi 0, %s86
    %s89 = sphi 0, %s88
    %s103 = sphi 0, %s89
    %s109 = sphi 0, %s111
    %s112 = sphi 0, %s109
    %s113 = sphi 0, %s112
    %s129 = sphi 0, %s113
  $region4: #{aligner_forward.3} parent=0 // loop_header_branch
    %13 = sbr.rel (%p11) target = $region8
  $region5: #{aligner_forward.3} parent=0 // loop_body
    %s15 = ssub.s32 %s10, 1
    %s16 = ssub.s32 %s10, 2
    %s17 = sadd.s32 %s10, 1
    %s18 = ssub.s32 %s10, %s17
    %p19 = scmp.eq.s32.totalorder %s18, 0
    %s21 = sadd.s32 %s20, 1
    %s22 = scalar_select %p19, %s20, %s21
    %p25 = pneg %p19
    %p26 = scmp.eq.s32.totalorder %s10, 1
    %p27 = por %p25, %p26
    %p28 = scmp.ne.s32.totalorder %s20, %s23
    %p29 = scmp.eq.s32.totalorder %s10, 0
    %p30 = por %p28, %p29
    %p31 = scmp.ne.s32.totalorder %s20, %s23
    %p32 = scmp.eq.s32.totalorder %s15, 1
    %p33 = por %p31, %p32
    %p34 = scmp.ne.s32.totalorder %s23, %s24
    %p35 = scmp.eq.s32.totalorder %s15, 0
    %p36 = por %p34, %p35
    %p37 = scmp.ne.s32.totalorder %s23, %s24
    %p38 = scmp.eq.s32.totalorder %s16, 1
    %p39 = por %p37, %p38
    %p41 = scmp.ne.s32.totalorder %s24, %s40
    %p42 = scmp.eq.s32.totalorder %s16, 0
    %p43 = por %p41, %p42
    %s45 = sadd.s32 %s44, 1
    %p48 = scmp.eq.s32.totalorder %s10, 1
    %p49 = scmp.ne.s32.totalorder %s44, %s46
    %p50 = scmp.eq.s32.totalorder %s10, 0
    %p51 = por %p49, %p50
    %p52 = scmp.ne.s32.totalorder %s44, %s46
    %p53 = scmp.eq.s32.totalorder %s15, 1
    %p54 = por %p52, %p53
    %p55 = scmp.ne.s32.totalorder %s46, %s47
    %p56 = scmp.eq.s32.totalorder %s15, 0
    %p57 = por %p55, %p56
    %p58 = scmp.ne.s32.totalorder %s46, %s47
    %p59 = scmp.eq.s32.totalorder %s16, 1
    %p60 = por %p58, %p59
    %p62 = scmp.ne.s32.totalorder %s47, %s61
    %p63 = scmp.eq.s32.totalorder %s16, 0
    %p64 = por %p62, %p63
    %s66 = sadd.s32 %s65, 1
    %p69 = scmp.eq.s32.totalorder %s10, 1
    %p70 = scmp.ne.s32.totalorder %s65, %s67
    %p71 = scmp.eq.s32.totalorder %s10, 0
    %p72 = por %p70, %p71
    %p73 = scmp.ne.s32.totalorder %s65, %s67
    %p74 = scmp.eq.s32.totalorder %s15, 1
    %p75 = por %p73, %p74
    %p76 = scmp.ne.s32.totalorder %s67, %s68
    %p77 = scmp.eq.s32.totalorder %s15, 0
    %p78 = por %p76, %p77
    %p79 = scmp.ne.s32.totalorder %s67, %s68
    %p80 = scmp.eq.s32.totalorder %s16, 1
    %p81 = por %p79, %p80
    %p83 = scmp.ne.s32.totalorder %s68, %s82
    %p84 = scmp.eq.s32.totalorder %s16, 0
    %p85 = por %p83, %p84
    %s87 = sadd.s32 %s86, 1
    %p90 = scmp.eq.s32.totalorder %s10, 1
    %p91 = scmp.ne.s32.totalorder %s86, %s88
    %p92 = scmp.eq.s32.totalorder %s10, 0
    %p93 = por %p91, %p92
    %p94 = scmp.ne.s32.totalorder %s86, %s88
    %p95 = scmp.eq.s32.totalorder %s15, 1
    %p96 = por %p94, %p95
    %p97 = scmp.ne.s32.totalorder %s88, %s89
    %p98 = scmp.eq.s32.totalorder %s15, 0
    %p99 = por %p97, %p98
    %p100 = scmp.ne.s32.totalorder %s88, %s89
    %p101 = scmp.eq.s32.totalorder %s16, 1
    %p102 = por %p100, %p101
    %p104 = scmp.ne.s32.totalorder %s89, %s103
    %p105 = scmp.eq.s32.totalorder %s16, 0
    %p106 = por %p104, %p105
    %s107 = ssub.s32 %s10, %s17
    %p108 = scmp.eq.s32.totalorder %s107, 0
    %s110 = sadd.s32 %s109, 1
    %s111 = scalar_select %p108, %s109, %s110
    %p114 = pneg %p108
    %p115 = scmp.eq.s32.totalorder %s10, 1
    %p116 = por %p114, %p115
    %p117 = scmp.ne.s32.totalorder %s109, %s112
    %p118 = scmp.eq.s32.totalorder %s10, 0
    %p119 = por %p117, %p118
    %p120 = scmp.ne.s32.totalorder %s109, %s112
    %p121 = scmp.eq.s32.totalorder %s15, 1
    %p122 = por %p120, %p121
    %p123 = scmp.ne.s32.totalorder %s112, %s113
    %p124 = scmp.eq.s32.totalorder %s15, 0
    %p125 = por %p123, %p124
    %p126 = scmp.ne.s32.totalorder %s112, %s113
    %p127 = scmp.eq.s32.totalorder %s16, 1
    %p128 = por %p126, %p127
    %p130 = scmp.ne.s32.totalorder %s113, %s129
    %p131 = scmp.eq.s32.totalorder %s16, 0
    %p132 = por %p130, %p131
    %p133 = scmp.le.s32.totalorder 1, %s10
    %p134 = scmp.lt.s32.totalorder %s10, 3
    %p135 = pnand %p133, %p134
    %p136 = pneg %p135
    // Predicated region
    $region9: #{aligner_forward.3} parent=5 // pred_check
      _
    $region10: #{aligner_forward.3} parent=5 // pred_check_branch
      %138 = sbr.rel (%p135) target = $region12
    $region11: #{aligner_forward.3} parent=5 // pred_region
      %s139 = ssub.s32 %s10, 1
      // Predicated region
      $region13: #{aligner_forward.3} parent=11 // pred_check
        %p140 = pneg %p57
      $region14: #{aligner_forward.3} parent=11 // pred_check_branch
        %142 = sbr.rel (%p140) target = $region16
      $region15: #{aligner_forward.3} parent=11 // pred_region
        _
      $region16: #{aligner_forward.3} parent=11 // pred_fallthru
        _
      // Predicated region
      $region17: #{aligner_forward.3} parent=11 // pred_check
        %p143 = pneg %p78
      $region18: #{aligner_forward.3} parent=11 // pred_check_branch
        %145 = sbr.rel (%p143) target = $region20
      $region19: #{aligner_forward.3} parent=11 // pred_region
        _
      $region20: #{aligner_forward.3} parent=11 // pred_fallthru
        _
      // Predicated region
      $region21: #{aligner_forward.3} parent=11 // pred_check
        %p146 = pneg %p99
      $region22: #{aligner_forward.3} parent=11 // pred_check_branch
        %148 = sbr.rel (%p146) target = $region24
      $region23: #{aligner_forward.3} parent=11 // pred_region
        _
      $region24: #{aligner_forward.3} parent=11 // pred_fallthru
        _
    $region12: #{aligner_forward.3} parent=5 // pred_fallthru
      _
    %p149 = scmp.lt.s32.totalorder %s10, 2
    // Predicated region
    $region25: #{aligner_forward.3} parent=5 // pred_check
      %p150 = pneg %p149
    $region26: #{aligner_forward.3} parent=5 // pred_check_branch
      %152 = sbr.rel (%p150) target = $region28
    $region27: #{aligner_forward.3} parent=5 // pred_region
      // Predicated region
      $region29: #{aligner_forward.3} parent=27 // pred_check
        %p153 = pneg %p30
      $region30: #{aligner_forward.3} parent=27 // pred_check_branch
        %155 = sbr.rel (%p153) target = $region32
      $region31: #{aligner_forward.3} parent=27 // pred_region
        %p156 = scmp.lt.s32.totalorder %s10, 1
        %s157 = scalar_select %p156, %s10, 1
        %s158 = smul.addr %s157, 4
        %s159 = scalar_lea.vmem %s0, %s158
      $region32: #{aligner_forward.3} parent=27 // pred_fallthru
        _
    $region28: #{aligner_forward.3} parent=5 // pred_fallthru
      _
    %p160 = scmp.le.s32.totalorder 1, %s10
    %p161 = scmp.lt.s32.totalorder %s10, 3
    %p162 = pnand %p160, %p161
    %p163 = pneg %p162
    // Predicated region
    $region33: #{aligner_forward.3} parent=5 // pred_check
      _
    $region34: #{aligner_forward.3} parent=5 // pred_check_branch
      %165 = sbr.rel (%p162) target = $region36
    $region35: #{aligner_forward.3} parent=5 // pred_region
      %s166 = ssub.s32 %s10, 1
      %p167 = scmp.lt.s32.totalorder %s15, 1
      %s168 = scalar_select %p167, %s15, 1
      %s169 = smul.addr %s168, 4
      %s170 = scalar_lea.vmem %s0, %s169
      %p171 = pneg %p36
      %p172 = pneg %p33
      %p173 = pneg %p57
      %p174 = pneg %p54
      %p175 = pneg %p78
      %p176 = pneg %p75
      %p177 = pneg %p99
      %p178 = pneg %p96
      %p179 = pneg %p125
      %p180 = pneg %p122
      %p181 = scmp.lt.s32.totalorder %s15, 1
      %s182 = scalar_select %p181, %s15, 1
      %s183 = smul.addr %s182, 4
      %s184 = smul.addr %s183, 4
      %s185 = scalar_lea.vmem %s4, %s184
      %p186 = scmp.lt.s32.totalorder %s15, 1
      %s187 = scalar_select %p186, %s15, 1
      %s188 = smul.addr %s187, 4
      %s189 = scalar_lea.vmem %s0, %s188
      %p190 = scmp.lt.s32.totalorder %s15, 1
      %s191 = scalar_select %p190, %s15, 1
      %s192 = smul.addr %s191, 4
      %s193 = smul.addr %s192, 4
      %s194 = scalar_lea.vmem %s4, %s193
      %v196 = vld [vmem:[%s189] sm:$0xf]
      %v197 = vunpack.c.l.bf16 %v196
      %v198 = vlaneseq
      %v199 = vand.u32 %v198, 127
      %vm200 = vcmp.ge.s32.totalorder %v199, 2
      %vm201 = vcmp.lt.s32.totalorder %v199, 10
      %vm202 = vmand %vm200, %vm201
      %v203 = vsel %vm202, 1, 0
      %vm204 = vcmp.eq.s32.totalorder %v203, 1
      %v205 = vsel %vm204, %v197, 0.0
      %207 = vrot.lane.b32.xlu0 %v205, 127
      %v208 = vpop.permute.xlu0 %207
      %210 = vrot.lane.b32.xlu0 %v205, 126
      %v211 = vpop.permute.xlu0 %210
      %v213 = vld [vmem:[%s1] sm:$0xf]
      %v214 = vld [vmem:[%s1 + $0x4] sm:$0xf]
      %v215 = vld [vmem:[%s1 + $0x8] sm:$0xf]
      %v216 = vld [vmem:[%s1 + $0xc] sm:$0xf]
      %v217 = vpack.c.bf16 %v208, %v205
      %v218 = vpack.c.bf16 %v211, %v211
      %v219 = vld [vmem:[%s3] sm:$0xff]
      %v220 = vld [vmem:[%s3 + $0x8] sm:$0xff]
      %v221 = vld [vmem:[%s3 + $0x10] sm:$0xff]
      %v222 = vld [vmem:[%s3 + $0x18] sm:$0xff]
      %224 = vset.pattern.permute.xlu0 0
      %225 = vperm.xlu0 %224, %v219
      %v226 = vpop.permute.xlu0 %225
      %229 = vset.pattern.permute.xlu0 0
      %230 = vperm.xlu0 %229, %v220
      %v231 = vpop.permute.xlu0 %230
      %234 = vset.pattern.permute.xlu0 0
      %235 = vperm.xlu0 %234, %v221
      %v236 = vpop.permute.xlu0 %235
      %239 = vset.pattern.permute.xlu0 0
      %240 = vperm.xlu0 %239, %v222
      %v241 = vpop.permute.xlu0 %240
      %v247 = vunpack.c.l.b16 %v213
      %v248 = vunpack.c.l.b16 %v214
      %v249 = vunpack.c.l.b16 %v215
      %v250 = vunpack.c.l.b16 %v216
      %v251 = vpack.c.b16 %v248, %v247
      %v252 = vpack.c.b16 %v250, %v249
      %vm253 = vcmask 195584
      %v255 = vsel %vm253, %v251, 0
      %v258 = vsel %vm253, %v252, 0
      %vm260 = vcmask 1043456
      %v262 = vsel %vm260, %v218, 0
      %264 = vmatprep.subr.bf16.mxu0 0
      %265 = vmatpush1.bf16.msra.mxu0 0
      %266 = vmatprep.subr.bf16.mxu0 0
      %267 = vmatpush1.bf16.msra.mxu0 0
      %268 = vmatprep.subr.bf16.mxu0 0
      %269 = vmatpush1.bf16.msra.mxu0 0
      %270 = vmatprep.subr.bf16.mxu0 0
      %271 = vmatpush1.bf16.msra.mxu0 0
      %272 = vmatprep.subr.bf16.mxu0 0
      %273 = vmatpush1.bf16.msra.mxu0 0
      %274 = vmatprep.subr.bf16.mxu0 0
      %275 = vmatpush1.bf16.msra.mxu0 0
      %276 = vmatprep.subr.bf16.mxu0 0
      %277 = vmatpush1.bf16.msra.mxu0 %v262
      %278 = vmatprep.subr.bf16.mxu0 0
      %279 = vmatpush1.bf16.msra.mxu0 %v217
      %280 = vmatprep.subr.bf16.mxu0 0
      %281 = vmatpush2.bf16.msra.mxu0 0
      %282 = vmatprep.subr.bf16.mxu0 0
      %283 = vmatpush2.bf16.msra.mxu0 0
      %284 = vmatprep.subr.bf16.mxu0 0
      %285 = vmatpush2.bf16.msra.mxu0 0
      %286 = vmatprep.subr.bf16.mxu0 0
      %287 = vmatpush2.bf16.msra.mxu0 0
      %288 = vmatprep.subr.bf16.mxu0 0
      %289 = vmatpush2.bf16.msra.mxu0 0
      %290 = vmatprep.subr.bf16.mxu0 0
      %291 = vmatpush2.bf16.msra.mxu0 0
      %292 = vmatprep.subr.bf16.mxu0 0
      %293 = vmatpush2.bf16.msra.mxu0 0
      %294 = vmatprep.subr.bf16.mxu0 0
      %295 = vmatpush2.bf16.msra.mxu0 0
      %296 = vmatprep.mubr.bf16.mxu0 0
      %297 = vmatmul.mubr.bf16.gmra.mxu0 %v255
      %v298 = vpop.f32.mrf.mxu0
      %v299 = vadd.f32 %v226, %v298
      %v300 = vpop.f32.mrf.mxu0
      %v301 = vpop.f32.mrf.mxu0
      %v302 = vadd.f32 %v231, %v301
      %v303 = vpop.f32.mrf.mxu0
      %304 = vmatprep.mubr.bf16.mxu0 0
      %305 = vmatmul.mubr.bf16.gmra.mxu0 %v258
      %v306 = vpop.f32.mrf.mxu0
      %v307 = vadd.f32 %v236, %v306
      %v308 = vpop.f32.mrf.mxu0
      %v309 = vpop.f32.mrf.mxu0
      %v310 = vadd.f32 %v241, %v309
      %v311 = vpop.f32.mrf.mxu0
      %312 = vdwg.mxu0
      %vm313 = vcmp.ge.f32.partialorder %v299, 0.0
      %vm314 = vcmp.ge.f32.partialorder %v302, 0.0
      %vm315 = vcmp.ge.f32.partialorder %v307, 0.0
      %vm316 = vcmp.ge.f32.partialorder %v310, 0.0
      %v317 = vmul.f32 %v299, 0.3
      %v318 = vmul.f32 %v302, 0.3
      %v319 = vmul.f32 %v307, 0.3
      %v320 = vmul.f32 %v310, 0.3
      %v321 = vsel %vm313, %v299, %v317
      %v322 = vsel %vm314, %v302, %v318
      %v323 = vsel %vm315, %v307, %v319
      %v324 = vsel %vm316, %v310, %v320
      %vm325 = vcmp.ge.s32.totalorder %v199, 1
      %vm326 = vcmp.lt.s32.totalorder %v199, 9
      %vm327 = vmand %vm325, %vm326
      %v328 = vsel %vm327, 1, 0
      %vm329 = vcmp.eq.s32.totalorder %v328, 1
      %v330 = vsel %vm329, %v321, 0.0
      %v331 = vsel %vm329, %v322, 0.0
      %v332 = vsel %vm329, %v323, 0.0
      %v333 = vsel %vm329, %v324, 0.0
      %338 = vrot.lane.b32.xlu0 %v330, 127
      %v339 = vpop.permute.xlu0 %338
      %340 = vrot.lane.b32.xlu0 %v331, 127
      %v341 = vpop.permute.xlu0 %340
      %342 = vrot.lane.b32.xlu0 %v332, 127
      %v343 = vpop.permute.xlu0 %342
      %344 = vrot.lane.b32.xlu0 %v333, 127
      %v345 = vpop.permute.xlu0 %344
      %350 = vrot.lane.b32.xlu0 %v330, 126
      %v351 = vpop.permute.xlu0 %350
      %352 = vrot.lane.b32.xlu0 %v331, 126
      %v353 = vpop.permute.xlu0 %352
      %354 = vrot.lane.b32.xlu0 %v332, 126
      %v355 = vpop.permute.xlu0 %354
      %356 = vrot.lane.b32.xlu0 %v333, 126
      %v357 = vpop.permute.xlu0 %356
      %v362 = vld [vmem:[%s2] sm:$0xf]
      %v363 = vld [vmem:[%s2 + $0x4] sm:$0xf]
      %v364 = vld [vmem:[%s2 + $0x8] sm:$0xf]
      %v365 = vld [vmem:[%s2 + $0xc] sm:$0xf]
      %v366 = vpack.c.bf16 %v331, %v330
      %v367 = vpack.c.bf16 %v333, %v332
      %v368 = vpack.c.bf16 %v341, %v339
      %v369 = vpack.c.bf16 %v345, %v343
      %v370 = vpack.c.bf16 %v353, %v351
      %v371 = vpack.c.bf16 %v357, %v355
      %s372 = scalar_lea.vmem %s3, 32
      %v373 = vld [vmem:[%s372] sm:$0xff]
      %v374 = vld [vmem:[%s372 + $0x8] sm:$0xff]
      %v375 = vld [vmem:[%s372 + $0x10] sm:$0xff]
      %v376 = vld [vmem:[%s372 + $0x18] sm:$0xff]
      %378 = vset.pattern.permute.xlu0 0
      %379 = vperm.xlu0 %378, %v373
      %v380 = vpop.permute.xlu0 %379
      %383 = vset.pattern.permute.xlu0 0
      %384 = vperm.xlu0 %383, %v374
      %v385 = vpop.permute.xlu0 %384
      %388 = vset.pattern.permute.xlu0 0
      %389 = vperm.xlu0 %388, %v375
      %v390 = vpop.permute.xlu0 %389
      %393 = vset.pattern.permute.xlu0 0
      %394 = vperm.xlu0 %393, %v376
      %v395 = vpop.permute.xlu0 %394
      %v401 = vunpack.c.l.b16 %v362
      %v402 = vunpack.c.l.b16 %v363
      %v403 = vunpack.c.l.b16 %v364
      %v404 = vunpack.c.l.b16 %v365
      %v405 = vpack.c.b16 %v402, %v401
      %v406 = vpack.c.b16 %v404, %v403
      %vm407 = vcmask 785408
      %v409 = vsel %vm407, %v405, 0
      %v412 = vsel %vm407, %v406, 0
      %414 = vmatprep.subr.bf16.mxu0 0
      %415 = vmatpush1.bf16.msra.mxu0 0
      %416 = vmatprep.subr.bf16.mxu0 0
      %417 = vmatpush1.bf16.msra.mxu0 0
      %418 = vmatprep.subr.bf16.mxu0 0
      %419 = vmatpush1.bf16.msra.mxu0 %v371
      %420 = vmatprep.subr.bf16.mxu0 0
      %421 = vmatpush1.bf16.msra.mxu0 %v370
      %422 = vmatprep.subr.bf16.mxu0 0
      %423 = vmatpush1.bf16.msra.mxu0 %v369
      %424 = vmatprep.subr.bf16.mxu0 0
      %425 = vmatpush1.bf16.msra.mxu0 %v368
      %426 = vmatprep.subr.bf16.mxu0 0
      %427 = vmatpush1.bf16.msra.mxu0 %v367
      %428 = vmatprep.subr.bf16.mxu0 0
      %429 = vmatpush1.bf16.msra.mxu0 %v366
      %430 = vmatprep.subr.bf16.mxu0 0
      %431 = vmatpush2.bf16.msra.mxu0 0
      %432 = vmatprep.subr.bf16.mxu0 0
      %433 = vmatpush2.bf16.msra.mxu0 0
      %434 = vmatprep.subr.bf16.mxu0 0
      %435 = vmatpush2.bf16.msra.mxu0 0
      %436 = vmatprep.subr.bf16.mxu0 0
      %437 = vmatpush2.bf16.msra.mxu0 0
      %438 = vmatprep.subr.bf16.mxu0 0
      %439 = vmatpush2.bf16.msra.mxu0 0
      %440 = vmatprep.subr.bf16.mxu0 0
      %441 = vmatpush2.bf16.msra.mxu0 0
      %442 = vmatprep.subr.bf16.mxu0 0
      %443 = vmatpush2.bf16.msra.mxu0 0
      %444 = vmatprep.subr.bf16.mxu0 0
      %445 = vmatpush2.bf16.msra.mxu0 0
      %446 = vmatprep.mubr.bf16.mxu0 0
      %447 = vmatmul.mubr.bf16.gmra.mxu0 %v409
      %v448 = vpop.f32.mrf.mxu0
      %v449 = vadd.f32 %v380, %v448
      %v450 = vpop.f32.mrf.mxu0
      %v451 = vpop.f32.mrf.mxu0
      %v452 = vadd.f32 %v385, %v451
      %v453 = vpop.f32.mrf.mxu0
      %454 = vmatprep.mubr.bf16.mxu0 0
      %455 = vmatmul.mubr.bf16.gmra.mxu0 %v412
      %v456 = vpop.f32.mrf.mxu0
      %v457 = vadd.f32 %v390, %v456
      %v458 = vpop.f32.mrf.mxu0
      %v459 = vpop.f32.mrf.mxu0
      %v460 = vadd.f32 %v395, %v459
      %v461 = vpop.f32.mrf.mxu0
      %462 = vdwg.mxu0
      %vm463 = vcmp.ge.f32.partialorder %v449, 0.0
      %vm464 = vcmp.ge.f32.partialorder %v452, 0.0
      %vm465 = vcmp.ge.f32.partialorder %v457, 0.0
      %vm466 = vcmp.ge.f32.partialorder %v460, 0.0
      %v467 = vmul.f32 %v449, 0.3
      %v468 = vmul.f32 %v452, 0.3
      %v469 = vmul.f32 %v457, 0.3
      %v470 = vmul.f32 %v460, 0.3
      %v471 = vsel %vm463, %v449, %v467
      %v472 = vsel %vm464, %v452, %v468
      %v473 = vsel %vm465, %v457, %v469
      %v474 = vsel %vm466, %v460, %v470
      %v475 = vpack.c.bf16 %v472, %v471
      %v476 = vpack.c.bf16 %v474, %v473
      %v479 = vunpack.c.l.b16 %v475
      %v480 = vunpack.c.h.b16 %v475
      %v481 = vunpack.c.l.b16 %v476
      %v482 = vunpack.c.h.b16 %v476
      %v483 = vpack.c.b16 %v479, %v479
      %v484 = vpack.c.b16 %v480, %v480
      %v485 = vpack.c.b16 %v481, %v481
      %v486 = vpack.c.b16 %v482, %v482
      %vm491 = vcmask 60416
      %492 = vst.msk [vmem:[%s194] sm:$0xf] %vm491, %v483
      %493 = vst.msk [vmem:[%s194 + $0x4] sm:$0xf] %vm491, %v484
      %494 = vst.msk [vmem:[%s194 + $0x8] sm:$0xf] %vm491, %v485
      %495 = vst.msk [vmem:[%s194 + $0xc] sm:$0xf] %vm491, %v486
      %p496 = scmp.lt.s32.totalorder %s15, 1
      %s497 = scalar_select %p496, %s15, 1
      %s498 = smul.addr %s497, 4
      %s499 = smul.addr %s498, 4
      %s500 = scalar_lea.vmem %s4, %s499
      // Predicated region
      $region37: #{aligner_forward.3} parent=35 // pred_check
        %p501 = pneg %p122
      $region38: #{aligner_forward.3} parent=35 // pred_check_branch
        %503 = sbr.rel (%p501) target = $region40
      $region39: #{aligner_forward.3} parent=35 // pred_region
        _
      $region40: #{aligner_forward.3} parent=35 // pred_fallthru
        _
    $region36: #{aligner_forward.3} parent=5 // pred_fallthru
      _
    %p504 = scmp.le.s32.totalorder 2, %s10
    // Predicated region
    $region41: #{aligner_forward.3} parent=5 // pred_check
      %p505 = pneg %p504
    $region42: #{aligner_forward.3} parent=5 // pred_check_branch
      %507 = sbr.rel (%p505) target = $region44
    $region43: #{aligner_forward.3} parent=5 // pred_region
      %s508 = ssub.s32 %s10, 2
      // Predicated region
      $region45: #{aligner_forward.3} parent=43 // pred_check
        %p509 = pneg %p128
      $region46: #{aligner_forward.3} parent=43 // pred_check_branch
        %511 = sbr.rel (%p509) target = $region48
      $region47: #{aligner_forward.3} parent=43 // pred_region
        %p512 = scmp.lt.s32.totalorder %s16, 1
        %s513 = scalar_select %p512, %s16, 1
        %s514 = smul.addr %s513, 4
        %s515 = smul.addr %s514, 4
        %s516 = scalar_lea.vmem %s4, %s515
      $region48: #{aligner_forward.3} parent=43 // pred_fallthru
        _
    $region44: #{aligner_forward.3} parent=5 // pred_fallthru
      _
  $region6: #{aligner_forward.3} parent=0 // loop_footer
    %s14 = sadd.s32 1, %s10
  $region7: #{aligner_forward.3} parent=0 // loop_footer_branch
    %9 = sbr.rel target = $region3
  $region8: #{aligner_forward.3} parent=0 // loop_exit
    _

// kernel: aligner_forward.4
$region0: #{aligner_forward.4}
  #allocation0 [shape = 'u32[]', space=smem, size = 0x4, offset = 0x4, fixed_abs, tag = 'smem constant byte address 0x4 - core index']
  #allocation1 [shape = 'u32[144,128]{1,0:T(1,128)}', space=vmem, size = 0x12000, scoped, tag = 'internal scratch']
  %s0 = inlined_call_operand.vmem [shape: bf16[2,8,34], index: 0, kind: input, shape index: {}]
  %s1 = inlined_call_operand.vmem [shape: bf16[32,56], index: 1, kind: input, shape index: {}]
  %s2 = inlined_call_operand.vmem [shape: bf16[2,32,224], index: 2, kind: input, shape index: {}]
  %s3 = inlined_call_operand.vmem [shape: f32[3,32,1], index: 3, kind: input, shape index: {}]
  %s4 = inlined_call_operand.vmem [shape: bf16[2,32,16], index: 4, kind: output, shape index: {}]
  %s5 = sld [smem:[#allocation0]]
  $region49: #{aligner_forward.4} parent=0
    _
  %s7 = ssub.s32 1, %s5
  %s8 = scalar_select 0, %s7, %s5
  loop: start=0, step=1, limit=4
  $region2: #{aligner_forward.4} parent=0 // loop_pre_header
    _
  $region3: #{aligner_forward.4} parent=0 // loop_header
    %s10 = sphi 0, %s14
    %p11 = scmp.ge.s32.totalorder %s10, 4
    %s20 = sphi 0, %s22
    %s23 = sphi 0, %s20
    %s24 = sphi 0, %s23
    %s40 = sphi 0, %s24
    %s44 = sphi 0, %s44
    %s46 = sphi 0, %s44
    %s47 = sphi 0, %s46
    %s61 = sphi 0, %s47
    %s65 = sphi 0, %s65
    %s67 = sphi 0, %s65
    %s68 = sphi 0, %s67
    %s82 = sphi 0, %s68
    %s86 = sphi 0, %s86
    %s88 = sphi 0, %s86
    %s89 = sphi 0, %s88
    %s103 = sphi 0, %s89
    %s109 = sphi 0, %s111
    %s112 = sphi 0, %s109
    %s113 = sphi 0, %s112
    %s129 = sphi 0, %s113
  $region4: #{aligner_forward.4} parent=0 // loop_header_branch
    %13 = sbr.rel (%p11) target = $region8
  $region5: #{aligner_forward.4} parent=0 // loop_body
    %s15 = ssub.s32 %s10, 1
    %s16 = ssub.s32 %s10, 2
    %s17 = sadd.s32 %s10, 1
    %s18 = ssub.s32 %s10, %s17
    %p19 = scmp.eq.s32.totalorder %s18, 0
    %s21 = sadd.s32 %s20, 1
    %s22 = scalar_select %p19, %s20, %s21
    %p25 = pneg %p19
    %p26 = scmp.eq.s32.totalorder %s10, 1
    %p27 = por %p25, %p26
    %p28 = scmp.ne.s32.totalorder %s20, %s23
    %p29 = scmp.eq.s32.totalorder %s10, 0
    %p30 = por %p28, %p29
    %p31 = scmp.ne.s32.totalorder %s20, %s23
    %p32 = scmp.eq.s32.totalorder %s15, 1
    %p33 = por %p31, %p32
    %p34 = scmp.ne.s32.totalorder %s23, %s24
    %p35 = scmp.eq.s32.totalorder %s15, 0
    %p36 = por %p34, %p35
    %p37 = scmp.ne.s32.totalorder %s23, %s24
    %p38 = scmp.eq.s32.totalorder %s16, 1
    %p39 = por %p37, %p38
    %p41 = scmp.ne.s32.totalorder %s24, %s40
    %p42 = scmp.eq.s32.totalorder %s16, 0
    %p43 = por %p41, %p42
    %s45 = sadd.s32 %s44, 1
    %p48 = scmp.eq.s32.totalorder %s10, 1
    %p49 = scmp.ne.s32.totalorder %s44, %s46
    %p50 = scmp.eq.s32.totalorder %s10, 0
    %p51 = por %p49, %p50
    %p52 = scmp.ne.s32.totalorder %s44, %s46
    %p53 = scmp.eq.s32.totalorder %s15, 1
    %p54 = por %p52, %p53
    %p55 = scmp.ne.s32.totalorder %s46, %s47
    %p56 = scmp.eq.s32.totalorder %s15, 0
    %p57 = por %p55, %p56
    %p58 = scmp.ne.s32.totalorder %s46, %s47
    %p59 = scmp.eq.s32.totalorder %s16, 1
    %p60 = por %p58, %p59
    %p62 = scmp.ne.s32.totalorder %s47, %s61
    %p63 = scmp.eq.s32.totalorder %s16, 0
    %p64 = por %p62, %p63
    %s66 = sadd.s32 %s65, 1
    %p69 = scmp.eq.s32.totalorder %s10, 1
    %p70 = scmp.ne.s32.totalorder %s65, %s67
    %p71 = scmp.eq.s32.totalorder %s10, 0
    %p72 = por %p70, %p71
    %p73 = scmp.ne.s32.totalorder %s65, %s67
    %p74 = scmp.eq.s32.totalorder %s15, 1
    %p75 = por %p73, %p74
    %p76 = scmp.ne.s32.totalorder %s67, %s68
    %p77 = scmp.eq.s32.totalorder %s15, 0
    %p78 = por %p76, %p77
    %p79 = scmp.ne.s32.totalorder %s67, %s68
    %p80 = scmp.eq.s32.totalorder %s16, 1
    %p81 = por %p79, %p80
    %p83 = scmp.ne.s32.totalorder %s68, %s82
    %p84 = scmp.eq.s32.totalorder %s16, 0
    %p85 = por %p83, %p84
    %s87 = sadd.s32 %s86, 1
    %p90 = scmp.eq.s32.totalorder %s10, 1
    %p91 = scmp.ne.s32.totalorder %s86, %s88
    %p92 = scmp.eq.s32.totalorder %s10, 0
    %p93 = por %p91, %p92
    %p94 = scmp.ne.s32.totalorder %s86, %s88
    %p95 = scmp.eq.s32.totalorder %s15, 1
    %p96 = por %p94, %p95
    %p97 = scmp.ne.s32.totalorder %s88, %s89
    %p98 = scmp.eq.s32.totalorder %s15, 0
    %p99 = por %p97, %p98
    %p100 = scmp.ne.s32.totalorder %s88, %s89
    %p101 = scmp.eq.s32.totalorder %s16, 1
    %p102 = por %p100, %p101
    %p104 = scmp.ne.s32.totalorder %s89, %s103
    %p105 = scmp.eq.s32.totalorder %s16, 0
    %p106 = por %p104, %p105
    %s107 = ssub.s32 %s10, %s17
    %p108 = scmp.eq.s32.totalorder %s107, 0
    %s110 = sadd.s32 %s109, 1
    %s111 = scalar_select %p108, %s109, %s110
    %p114 = pneg %p108
    %p115 = scmp.eq.s32.totalorder %s10, 1
    %p116 = por %p114, %p115
    %p117 = scmp.ne.s32.totalorder %s109, %s112
    %p118 = scmp.eq.s32.totalorder %s10, 0
    %p119 = por %p117, %p118
    %p120 = scmp.ne.s32.totalorder %s109, %s112
    %p121 = scmp.eq.s32.totalorder %s15, 1
    %p122 = por %p120, %p121
    %p123 = scmp.ne.s32.totalorder %s112, %s113
    %p124 = scmp.eq.s32.totalorder %s15, 0
    %p125 = por %p123, %p124
    %p126 = scmp.ne.s32.totalorder %s112, %s113
    %p127 = scmp.eq.s32.totalorder %s16, 1
    %p128 = por %p126, %p127
    %p130 = scmp.ne.s32.totalorder %s113, %s129
    %p131 = scmp.eq.s32.totalorder %s16, 0
    %p132 = por %p130, %p131
    %p133 = scmp.le.s32.totalorder 1, %s10
    %p134 = scmp.lt.s32.totalorder %s10, 3
    %p135 = pnand %p133, %p134
    %p136 = pneg %p135
    // Predicated region
    $region9: #{aligner_forward.4} parent=5 // pred_check
      _
    $region10: #{aligner_forward.4} parent=5 // pred_check_branch
      %138 = sbr.rel (%p135) target = $region12
    $region11: #{aligner_forward.4} parent=5 // pred_region
      %s139 = ssub.s32 %s10, 1
      // Predicated region
      $region13: #{aligner_forward.4} parent=11 // pred_check
        %p140 = pneg %p57
      $region14: #{aligner_forward.4} parent=11 // pred_check_branch
        %142 = sbr.rel (%p140) target = $region16
      $region15: #{aligner_forward.4} parent=11 // pred_region
        _
      $region16: #{aligner_forward.4} parent=11 // pred_fallthru
        _
      // Predicated region
      $region17: #{aligner_forward.4} parent=11 // pred_check
        %p143 = pneg %p78
      $region18: #{aligner_forward.4} parent=11 // pred_check_branch
        %145 = sbr.rel (%p143) target = $region20
      $region19: #{aligner_forward.4} parent=11 // pred_region
        _
      $region20: #{aligner_forward.4} parent=11 // pred_fallthru
        _
      // Predicated region
      $region21: #{aligner_forward.4} parent=11 // pred_check
        %p146 = pneg %p99
      $region22: #{aligner_forward.4} parent=11 // pred_check_branch
        %148 = sbr.rel (%p146) target = $region24
      $region23: #{aligner_forward.4} parent=11 // pred_region
        _
      $region24: #{aligner_forward.4} parent=11 // pred_fallthru
        _
    $region12: #{aligner_forward.4} parent=5 // pred_fallthru
      _
    %p149 = scmp.lt.s32.totalorder %s10, 2
    // Predicated region
    $region25: #{aligner_forward.4} parent=5 // pred_check
      %p150 = pneg %p149
    $region26: #{aligner_forward.4} parent=5 // pred_check_branch
      %152 = sbr.rel (%p150) target = $region28
    $region27: #{aligner_forward.4} parent=5 // pred_region
      // Predicated region
      $region29: #{aligner_forward.4} parent=27 // pred_check
        %p153 = pneg %p30
      $region30: #{aligner_forward.4} parent=27 // pred_check_branch
        %155 = sbr.rel (%p153) target = $region32
      $region31: #{aligner_forward.4} parent=27 // pred_region
        %p156 = scmp.lt.s32.totalorder %s10, 1
        %s157 = scalar_select %p156, %s10, 1
        %s158 = smul.addr %s157, 4
        %s159 = scalar_lea.vmem %s0, %s158
      $region32: #{aligner_forward.4} parent=27 // pred_fallthru
        _
    $region28: #{aligner_forward.4} parent=5 // pred_fallthru
      _
    %p160 = scmp.le.s32.totalorder 1, %s10
    %p161 = scmp.lt.s32.totalorder %s10, 3
    %p162 = pnand %p160, %p161
    %p163 = pneg %p162
    // Predicated region
    $region33: #{aligner_forward.4} parent=5 // pred_check
      _
    $region34: #{aligner_forward.4} parent=5 // pred_check_branch
      %165 = sbr.rel (%p162) target = $region36
    $region35: #{aligner_forward.4} parent=5 // pred_region
      %s166 = ssub.s32 %s10, 1
      %p167 = scmp.lt.s32.totalorder %s15, 1
      %s168 = scalar_select %p167, %s15, 1
      %s169 = smul.addr %s168, 4
      %s170 = scalar_lea.vmem %s0, %s169
      %p171 = pneg %p36
      %p172 = pneg %p33
      %p173 = pneg %p57
      %p174 = pneg %p54
      %p175 = pneg %p78
      %p176 = pneg %p75
      %p177 = pneg %p99
      %p178 = pneg %p96
      %p179 = pneg %p125
      %p180 = pneg %p122
      %p181 = scmp.lt.s32.totalorder %s15, 1
      %s182 = scalar_select %p181, %s15, 1
      %s183 = smul.addr %s182, 4
      %s184 = smul.addr %s183, 4
      %s185 = scalar_lea.vmem %s4, %s184
      %p186 = scmp.lt.s32.totalorder %s15, 1
      %s187 = scalar_select %p186, %s15, 1
      %s188 = smul.addr %s187, 4
      %s189 = scalar_lea.vmem %s0, %s188
      %p190 = scmp.lt.s32.totalorder %s15, 1
      %s191 = scalar_select %p190, %s15, 1
      %s192 = smul.addr %s191, 4
      %s193 = smul.addr %s192, 4
      %s194 = scalar_lea.vmem %s4, %s193
      %v196 = vld [vmem:[%s189] sm:$0xf]
      %v197 = vunpack.c.l.bf16 %v196
      %v198 = vlaneseq
      %v199 = vand.u32 %v198, 127
      %vm200 = vcmp.ge.s32.totalorder %v199, 9
      %vm201 = vcmp.lt.s32.totalorder %v199, 25
      %vm202 = vmand %vm200, %vm201
      %v203 = vsel %vm202, 1, 0
      %vm204 = vcmp.eq.s32.totalorder %v203, 1
      %v205 = vsel %vm204, %v197, 0.0
      %207 = vrot.lane.b32.xlu0 %v205, 127
      %v208 = vpop.permute.xlu0 %207
      %210 = vrot.lane.b32.xlu0 %v205, 126
      %v211 = vpop.permute.xlu0 %210
      %213 = vrot.lane.b32.xlu0 %v205, 125
      %v214 = vpop.permute.xlu0 %213
      %216 = vrot.lane.b32.xlu0 %v205, 124
      %v217 = vpop.permute.xlu0 %216
      %219 = vrot.lane.b32.xlu0 %v205, 123
      %v220 = vpop.permute.xlu0 %219
      %222 = vrot.lane.b32.xlu0 %v205, 122
      %v223 = vpop.permute.xlu0 %222
      %v225 = vld [vmem:[%s1] sm:$0xf]
      %v226 = vld [vmem:[%s1 + $0x4] sm:$0xf]
      %v227 = vld [vmem:[%s1 + $0x8] sm:$0xf]
      %v228 = vld [vmem:[%s1 + $0xc] sm:$0xf]
      %v229 = vpack.c.bf16 %v208, %v205
      %v230 = vpack.c.bf16 %v214, %v211
      %v231 = vpack.c.bf16 %v220, %v217
      %v232 = vpack.c.bf16 %v223, %v223
      %v233 = vld [vmem:[%s3] sm:$0xff]
      %v234 = vld [vmem:[%s3 + $0x8] sm:$0xff]
      %v235 = vld [vmem:[%s3 + $0x10] sm:$0xff]
      %v236 = vld [vmem:[%s3 + $0x18] sm:$0xff]
      %238 = vset.pattern.permute.xlu0 0
      %239 = vperm.xlu0 %238, %v233
      %v240 = vpop.permute.xlu0 %239
      %243 = vset.pattern.permute.xlu0 0
      %244 = vperm.xlu0 %243, %v234
      %v245 = vpop.permute.xlu0 %244
      %248 = vset.pattern.permute.xlu0 0
      %249 = vperm.xlu0 %248, %v235
      %v250 = vpop.permute.xlu0 %249
      %253 = vset.pattern.permute.xlu0 0
      %254 = vperm.xlu0 %253, %v236
      %v255 = vpop.permute.xlu0 %254
      %v261 = vunpack.c.l.b16 %v225
      %v262 = vunpack.c.l.b16 %v226
      %v263 = vunpack.c.l.b16 %v227
      %v264 = vunpack.c.l.b16 %v228
      %v265 = vpack.c.b16 %v262, %v261
      %v266 = vpack.c.b16 %v264, %v263
      %vm267 = vcmask 457728
      %v269 = vsel %vm267, %v265, 0
      %v272 = vsel %vm267, %v266, 0
      %vm274 = vcmask 1043456
      %v276 = vsel %vm274, %v232, 0
      %278 = vmatprep.subr.bf16.mxu0 0
      %279 = vmatpush1.bf16.msra.mxu0 0
      %280 = vmatprep.subr.bf16.mxu0 0
      %281 = vmatpush1.bf16.msra.mxu0 0
      %282 = vmatprep.subr.bf16.mxu0 0
      %283 = vmatpush1.bf16.msra.mxu0 0
      %284 = vmatprep.subr.bf16.mxu0 0
      %285 = vmatpush1.bf16.msra.mxu0 0
      %286 = vmatprep.subr.bf16.mxu0 0
      %287 = vmatpush1.bf16.msra.mxu0 %v276
      %288 = vmatprep.subr.bf16.mxu0 0
      %289 = vmatpush1.bf16.msra.mxu0 %v231
      %290 = vmatprep.subr.bf16.mxu0 0
      %291 = vmatpush1.bf16.msra.mxu0 %v230
      %292 = vmatprep.subr.bf16.mxu0 0
      %293 = vmatpush1.bf16.msra.mxu0 %v229
      %294 = vmatprep.subr.bf16.mxu0 0
      %295 = vmatpush2.bf16.msra.mxu0 0
      %296 = vmatprep.subr.bf16.mxu0 0
      %297 = vmatpush2.bf16.msra.mxu0 0
      %298 = vmatprep.subr.bf16.mxu0 0
      %299 = vmatpush2.bf16.msra.mxu0 0
      %300 = vmatprep.subr.bf16.mxu0 0
      %301 = vmatpush2.bf16.msra.mxu0 0
      %302 = vmatprep.subr.bf16.mxu0 0
      %303 = vmatpush2.bf16.msra.mxu0 0
      %304 = vmatprep.subr.bf16.mxu0 0
      %305 = vmatpush2.bf16.msra.mxu0 0
      %306 = vmatprep.subr.bf16.mxu0 0
      %307 = vmatpush2.bf16.msra.mxu0 0
      %308 = vmatprep.subr.bf16.mxu0 0
      %309 = vmatpush2.bf16.msra.mxu0 0
      %310 = vmatprep.mubr.bf16.mxu0 0
      %311 = vmatmul.mubr.bf16.gmra.mxu0 %v269
      %v312 = vpop.f32.mrf.mxu0
      %v313 = vadd.f32 %v240, %v312
      %v314 = vpop.f32.mrf.mxu0
      %v315 = vpop.f32.mrf.mxu0
      %v316 = vadd.f32 %v245, %v315
      %v317 = vpop.f32.mrf.mxu0
      %318 = vmatprep.mubr.bf16.mxu0 0
      %319 = vmatmul.mubr.bf16.gmra.mxu0 %v272
      %v320 = vpop.f32.mrf.mxu0
      %v321 = vadd.f32 %v250, %v320
      %v322 = vpop.f32.mrf.mxu0
      %v323 = vpop.f32.mrf.mxu0
      %v324 = vadd.f32 %v255, %v323
      %v325 = vpop.f32.mrf.mxu0
      %326 = vdwg.mxu0
      %vm327 = vcmp.ge.f32.partialorder %v313, 0.0
      %vm328 = vcmp.ge.f32.partialorder %v316, 0.0
      %vm329 = vcmp.ge.f32.partialorder %v321, 0.0
      %vm330 = vcmp.ge.f32.partialorder %v324, 0.0
      %v331 = vmul.f32 %v313, 0.3
      %v332 = vmul.f32 %v316, 0.3
      %v333 = vmul.f32 %v321, 0.3
      %v334 = vmul.f32 %v324, 0.3
      %v335 = vsel %vm327, %v313, %v331
      %v336 = vsel %vm328, %v316, %v332
      %v337 = vsel %vm329, %v321, %v333
      %v338 = vsel %vm330, %v324, %v334
      %vm339 = vcmp.ge.s32.totalorder %v199, 6
      %vm340 = vcmp.lt.s32.totalorder %v199, 22
      %vm341 = vmand %vm339, %vm340
      %v342 = vsel %vm341, 1, 0
      %vm343 = vcmp.eq.s32.totalorder %v342, 1
      %v344 = vsel %vm343, %v335, 0.0
      %v345 = vsel %vm343, %v336, 0.0
      %v346 = vsel %vm343, %v337, 0.0
      %v347 = vsel %vm343, %v338, 0.0
      %352 = vrot.lane.b32.xlu0 %v344, 127
      %v353 = vpop.permute.xlu0 %352
      %354 = vrot.lane.b32.xlu0 %v345, 127
      %v355 = vpop.permute.xlu0 %354
      %356 = vrot.lane.b32.xlu0 %v346, 127
      %v357 = vpop.permute.xlu0 %356
      %358 = vrot.lane.b32.xlu0 %v347, 127
      %v359 = vpop.permute.xlu0 %358
      %364 = vrot.lane.b32.xlu0 %v344, 126
      %v365 = vpop.permute.xlu0 %364
      %366 = vrot.lane.b32.xlu0 %v345, 126
      %v367 = vpop.permute.xlu0 %366
      %368 = vrot.lane.b32.xlu0 %v346, 126
      %v369 = vpop.permute.xlu0 %368
      %370 = vrot.lane.b32.xlu0 %v347, 126
      %v371 = vpop.permute.xlu0 %370
      %376 = vrot.lane.b32.xlu0 %v344, 125
      %v377 = vpop.permute.xlu0 %376
      %378 = vrot.lane.b32.xlu0 %v345, 125
      %v379 = vpop.permute.xlu0 %378
      %380 = vrot.lane.b32.xlu0 %v346, 125
      %v381 = vpop.permute.xlu0 %380
      %382 = vrot.lane.b32.xlu0 %v347, 125
      %v383 = vpop.permute.xlu0 %382
      %388 = vrot.lane.b32.xlu0 %v344, 124
      %v389 = vpop.permute.xlu0 %388
      %390 = vrot.lane.b32.xlu0 %v345, 124
      %v391 = vpop.permute.xlu0 %390
      %392 = vrot.lane.b32.xlu0 %v346, 124
      %v393 = vpop.permute.xlu0 %392
      %394 = vrot.lane.b32.xlu0 %v347, 124
      %v395 = vpop.permute.xlu0 %394
      %400 = vrot.lane.b32.xlu0 %v344, 123
      %v401 = vpop.permute.xlu0 %400
      %402 = vrot.lane.b32.xlu0 %v345, 123
      %v403 = vpop.permute.xlu0 %402
      %404 = vrot.lane.b32.xlu0 %v346, 123
      %v405 = vpop.permute.xlu0 %404
      %406 = vrot.lane.b32.xlu0 %v347, 123
      %v407 = vpop.permute.xlu0 %406
      %412 = vrot.lane.b32.xlu0 %v344, 122
      %v413 = vpop.permute.xlu0 %412
      %414 = vrot.lane.b32.xlu0 %v345, 122
      %v415 = vpop.permute.xlu0 %414
      %416 = vrot.lane.b32.xlu0 %v346, 122
      %v417 = vpop.permute.xlu0 %416
      %418 = vrot.lane.b32.xlu0 %v347, 122
      %v419 = vpop.permute.xlu0 %418
      %v424 = vld [vmem:[%s2] sm:$0xff]
      %v425 = vld [vmem:[%s2 + $0x8] sm:$0xff]
      %v426 = vld [vmem:[%s2 + $0x10] sm:$0xff]
      %v427 = vld [vmem:[%s2 + $0x18] sm:$0xff]
      %v428 = vpack.c.bf16 %v345, %v344
      %v429 = vpack.c.bf16 %v347, %v346
      %v430 = vpack.c.bf16 %v355, %v353
      %v431 = vpack.c.bf16 %v359, %v357
      %v432 = vpack.c.bf16 %v367, %v365
      %v433 = vpack.c.bf16 %v371, %v369
      %v434 = vpack.c.bf16 %v379, %v377
      %v435 = vpack.c.bf16 %v383, %v381
      %v436 = vpack.c.bf16 %v391, %v389
      %v437 = vpack.c.bf16 %v395, %v393
      %v438 = vpack.c.bf16 %v403, %v401
      %v439 = vpack.c.bf16 %v407, %v405
      %v440 = vpack.c.bf16 %v415, %v413
      %v441 = vpack.c.bf16 %v419, %v417
      %s442 = scalar_lea.vmem %s3, 32
      %v443 = vld [vmem:[%s442] sm:$0xff]
      %v444 = vld [vmem:[%s442 + $0x8] sm:$0xff]
      %v445 = vld [vmem:[%s442 + $0x10] sm:$0xff]
      %v446 = vld [vmem:[%s442 + $0x18] sm:$0xff]
      %448 = vset.pattern.permute.xlu0 0
      %449 = vperm.xlu0 %448, %v443
      %v450 = vpop.permute.xlu0 %449
      %453 = vset.pattern.permute.xlu0 0
      %454 = vperm.xlu0 %453, %v444
      %v455 = vpop.permute.xlu0 %454
      %458 = vset.pattern.permute.xlu0 0
      %459 = vperm.xlu0 %458, %v445
      %v460 = vpop.permute.xlu0 %459
      %463 = vset.pattern.permute.xlu0 0
      %464 = vperm.xlu0 %463, %v446
      %v465 = vpop.permute.xlu0 %464
      %v471 = vunpack.c.l.b16 %v424
      %v472 = vunpack.c.h.b16 %v424
      %v473 = vunpack.c.l.b16 %v425
      %v474 = vunpack.c.h.b16 %v425
      %v475 = vunpack.c.l.b16 %v426
      %v476 = vunpack.c.h.b16 %v426
      %v477 = vunpack.c.l.b16 %v427
      %v478 = vunpack.c.h.b16 %v427
      %v479 = vpack.c.b16 %v473, %v471
      %v480 = vpack.c.b16 %v474, %v472
      %v481 = vpack.c.b16 %v477, %v475
      %v482 = vpack.c.b16 %v478, %v476
      %vm485 = vcmask 785408
      %v487 = vsel %vm485, %v480, 0
      %v490 = vsel %vm485, %v482, 0
      %492 = vmatprep.subr.bf16.mxu0 0
      %493 = vmatpush1.bf16.msra.mxu0 %v435
      %494 = vmatprep.subr.bf16.mxu0 0
      %495 = vmatpush1.bf16.msra.mxu0 %v434
      %496 = vmatprep.subr.bf16.mxu0 0
      %497 = vmatpush1.bf16.msra.mxu0 %v433
      %498 = vmatprep.subr.bf16.mxu0 0
      %499 = vmatpush1.bf16.msra.mxu0 %v432
      %500 = vmatprep.subr.bf16.mxu0 0
      %501 = vmatpush1.bf16.msra.mxu0 %v431
      %502 = vmatprep.subr.bf16.mxu0 0
      %503 = vmatpush1.bf16.msra.mxu0 %v430
      %504 = vmatprep.subr.bf16.mxu0 0
      %505 = vmatpush1.bf16.msra.mxu0 %v429
      %506 = vmatprep.subr.bf16.mxu0 0
      %507 = vmatpush1.bf16.msra.mxu0 %v428
      %508 = vmatprep.subr.bf16.mxu0 0
      %509 = vmatpush2.bf16.msra.mxu0 0
      %510 = vmatprep.subr.bf16.mxu0 0
      %511 = vmatpush2.bf16.msra.mxu0 0
      %512 = vmatprep.subr.bf16.mxu0 0
      %513 = vmatpush2.bf16.msra.mxu0 %v441
      %514 = vmatprep.subr.bf16.mxu0 0
      %515 = vmatpush2.bf16.msra.mxu0 %v440
      %516 = vmatprep.subr.bf16.mxu0 0
      %517 = vmatpush2.bf16.msra.mxu0 %v439
      %518 = vmatprep.subr.bf16.mxu0 0
      %519 = vmatpush2.bf16.msra.mxu0 %v438
      %520 = vmatprep.subr.bf16.mxu0 0
      %521 = vmatpush2.bf16.msra.mxu0 %v437
      %522 = vmatprep.subr.bf16.mxu0 0
      %523 = vmatpush2.bf16.msra.mxu0 %v436
      %524 = vmatprep.mubr.bf16.mxu0 %v487
      %525 = vmatmul.mubr.bf16.gmra.mxu0 %v479
      %v526 = vpop.f32.mrf.mxu0
      %v527 = vadd.f32 %v450, %v526
      %v528 = vpop.f32.mrf.mxu0
      %v529 = vpop.f32.mrf.mxu0
      %v530 = vadd.f32 %v455, %v529
      %v531 = vpop.f32.mrf.mxu0
      %532 = vmatprep.mubr.bf16.mxu0 %v490
      %533 = vmatmul.mubr.bf16.gmra.mxu0 %v481
      %v534 = vpop.f32.mrf.mxu0
      %v535 = vadd.f32 %v460, %v534
      %v536 = vpop.f32.mrf.mxu0
      %v537 = vpop.f32.mrf.mxu0
      %v538 = vadd.f32 %v465, %v537
      %v539 = vpop.f32.mrf.mxu0
      %540 = vdwg.mxu0
      %vm541 = vcmp.ge.f32.partialorder %v527, 0.0
      %vm542 = vcmp.ge.f32.partialorder %v530, 0.0
      %vm543 = vcmp.ge.f32.partialorder %v535, 0.0
      %vm544 = vcmp.ge.f32.partialorder %v538, 0.0
      %v545 = vmul.f32 %v527, 0.3
      %v546 = vmul.f32 %v530, 0.3
      %v547 = vmul.f32 %v535, 0.3
      %v548 = vmul.f32 %v538, 0.3
      %v549 = vsel %vm541, %v527, %v545
      %v550 = vsel %vm542, %v530, %v546
      %v551 = vsel %vm543, %v535, %v547
      %v552 = vsel %vm544, %v538, %v548
      %vm553 = vcmp.ge.s32.totalorder %v199, 3
      %vm554 = vcmp.lt.s32.totalorder %v199, 19
      %vm555 = vmand %vm553, %vm554
      %v556 = vsel %vm555, 1, 0
      %vm557 = vcmp.eq.s32.totalorder %v556, 1
      %v558 = vsel %vm557, %v549, 0.0
      %v559 = vsel %vm557, %v550, 0.0
      %v560 = vsel %vm557, %v551, 0.0
      %v561 = vsel %vm557, %v552, 0.0
      %566 = vrot.lane.b32.xlu0 %v558, 127
      %v567 = vpop.permute.xlu0 %566
      %568 = vrot.lane.b32.xlu0 %v559, 127
      %v569 = vpop.permute.xlu0 %568
      %570 = vrot.lane.b32.xlu0 %v560, 127
      %v571 = vpop.permute.xlu0 %570
      %572 = vrot.lane.b32.xlu0 %v561, 127
      %v573 = vpop.permute.xlu0 %572
      %578 = vrot.lane.b32.xlu0 %v558, 126
      %v579 = vpop.permute.xlu0 %578
      %580 = vrot.lane.b32.xlu0 %v559, 126
      %v581 = vpop.permute.xlu0 %580
      %582 = vrot.lane.b32.xlu0 %v560, 126
      %v583 = vpop.permute.xlu0 %582
      %584 = vrot.lane.b32.xlu0 %v561, 126
      %v585 = vpop.permute.xlu0 %584
      %590 = vrot.lane.b32.xlu0 %v558, 125
      %v591 = vpop.permute.xlu0 %590
      %592 = vrot.lane.b32.xlu0 %v559, 125
      %v593 = vpop.permute.xlu0 %592
      %594 = vrot.lane.b32.xlu0 %v560, 125
      %v595 = vpop.permute.xlu0 %594
      %596 = vrot.lane.b32.xlu0 %v561, 125
      %v597 = vpop.permute.xlu0 %596
      %602 = vrot.lane.b32.xlu0 %v558, 124
      %v603 = vpop.permute.xlu0 %602
      %604 = vrot.lane.b32.xlu0 %v559, 124
      %v605 = vpop.permute.xlu0 %604
      %606 = vrot.lane.b32.xlu0 %v560, 124
      %v607 = vpop.permute.xlu0 %606
      %608 = vrot.lane.b32.xlu0 %v561, 124
      %v609 = vpop.permute.xlu0 %608
      %614 = vrot.lane.b32.xlu0 %v558, 123
      %v615 = vpop.permute.xlu0 %614
      %616 = vrot.lane.b32.xlu0 %v559, 123
      %v617 = vpop.permute.xlu0 %616
      %618 = vrot.lane.b32.xlu0 %v560, 123
      %v619 = vpop.permute.xlu0 %618
      %620 = vrot.lane.b32.xlu0 %v561, 123
      %v621 = vpop.permute.xlu0 %620
      %626 = vrot.lane.b32.xlu0 %v558, 122
      %v627 = vpop.permute.xlu0 %626
      %628 = vrot.lane.b32.xlu0 %v559, 122
      %v629 = vpop.permute.xlu0 %628
      %630 = vrot.lane.b32.xlu0 %v560, 122
      %v631 = vpop.permute.xlu0 %630
      %632 = vrot.lane.b32.xlu0 %v561, 122
      %v633 = vpop.permute.xlu0 %632
      %s638 = scalar_lea.vmem %s2, 32
      %v639 = vld [vmem:[%s638] sm:$0xff]
      %v640 = vld [vmem:[%s638 + $0x8] sm:$0xff]
      %v641 = vld [vmem:[%s638 + $0x10] sm:$0xff]
      %v642 = vld [vmem:[%s638 + $0x18] sm:$0xff]
      %v643 = vpack.c.bf16 %v559, %v558
      %v644 = vpack.c.bf16 %v561, %v560
      %v645 = vpack.c.bf16 %v569, %v567
      %v646 = vpack.c.bf16 %v573, %v571
      %v647 = vpack.c.bf16 %v581, %v579
      %v648 = vpack.c.bf16 %v585, %v583
      %v649 = vpack.c.bf16 %v593, %v591
      %v650 = vpack.c.bf16 %v597, %v595
      %v651 = vpack.c.bf16 %v605, %v603
      %v652 = vpack.c.bf16 %v609, %v607
      %v653 = vpack.c.bf16 %v617, %v615
      %v654 = vpack.c.bf16 %v621, %v619
      %v655 = vpack.c.bf16 %v629, %v627
      %v656 = vpack.c.bf16 %v633, %v631
      %s657 = scalar_lea.vmem %s3, 64
      %v658 = vld [vmem:[%s657] sm:$0xff]
      %v659 = vld [vmem:[%s657 + $0x8] sm:$0xff]
      %v660 = vld [vmem:[%s657 + $0x10] sm:$0xff]
      %v661 = vld [vmem:[%s657 + $0x18] sm:$0xff]
      %663 = vset.pattern.permute.xlu0 0
      %664 = vperm.xlu0 %663, %v658
      %v665 = vpop.permute.xlu0 %664
      %668 = vset.pattern.permute.xlu0 0
      %669 = vperm.xlu0 %668, %v659
      %v670 = vpop.permute.xlu0 %669
      %673 = vset.pattern.permute.xlu0 0
      %674 = vperm.xlu0 %673, %v660
      %v675 = vpop.permute.xlu0 %674
      %678 = vset.pattern.permute.xlu0 0
      %679 = vperm.xlu0 %678, %v661
      %v680 = vpop.permute.xlu0 %679
      %v686 = vunpack.c.l.b16 %v639
      %v687 = vunpack.c.h.b16 %v639
      %v688 = vunpack.c.l.b16 %v640
      %v689 = vunpack.c.h.b16 %v640
      %v690 = vunpack.c.l.b16 %v641
      %v691 = vunpack.c.h.b16 %v641
      %v692 = vunpack.c.l.b16 %v642
      %v693 = vunpack.c.h.b16 %v642
      %v694 = vpack.c.b16 %v688, %v686
      %v695 = vpack.c.b16 %v689, %v687
      %v696 = vpack.c.b16 %v692, %v690
      %v697 = vpack.c.b16 %v693, %v691
      %v701 = vsel %vm485, %v695, 0
      %v704 = vsel %vm485, %v697, 0
      %706 = vmatprep.subr.bf16.mxu0 0
      %707 = vmatpush1.bf16.msra.mxu0 %v650
      %708 = vmatprep.subr.bf16.mxu0 0
      %709 = vmatpush1.bf16.msra.mxu0 %v649
      %710 = vmatprep.subr.bf16.mxu0 0
      %711 = vmatpush1.bf16.msra.mxu0 %v648
      %712 = vmatprep.subr.bf16.mxu0 0
      %713 = vmatpush1.bf16.msra.mxu0 %v647
      %714 = vmatprep.subr.bf16.mxu0 0
      %715 = vmatpush1.bf16.msra.mxu0 %v646
      %716 = vmatprep.subr.bf16.mxu0 0
      %717 = vmatpush1.bf16.msra.mxu0 %v645
      %718 = vmatprep.subr.bf16.mxu0 0
      %719 = vmatpush1.bf16.msra.mxu0 %v644
      %720 = vmatprep.subr.bf16.mxu0 0
      %721 = vmatpush1.bf16.msra.mxu0 %v643
      %722 = vmatprep.subr.bf16.mxu0 0
      %723 = vmatpush2.bf16.msra.mxu0 0
      %724 = vmatprep.subr.bf16.mxu0 0
      %725 = vmatpush2.bf16.msra.mxu0 0
      %726 = vmatprep.subr.bf16.mxu0 0
      %727 = vmatpush2.bf16.msra.mxu0 %v656
      %728 = vmatprep.subr.bf16.mxu0 0
      %729 = vmatpush2.bf16.msra.mxu0 %v655
      %730 = vmatprep.subr.bf16.mxu0 0
      %731 = vmatpush2.bf16.msra.mxu0 %v654
      %732 = vmatprep.subr.bf16.mxu0 0
      %733 = vmatpush2.bf16.msra.mxu0 %v653
      %734 = vmatprep.subr.bf16.mxu0 0
      %735 = vmatpush2.bf16.msra.mxu0 %v652
      %736 = vmatprep.subr.bf16.mxu0 0
      %737 = vmatpush2.bf16.msra.mxu0 %v651
      %738 = vmatprep.mubr.bf16.mxu0 %v701
      %739 = vmatmul.mubr.bf16.gmra.mxu0 %v694
      %v740 = vpop.f32.mrf.mxu0
      %v741 = vadd.f32 %v665, %v740
      %v742 = vpop.f32.mrf.mxu0
      %v743 = vpop.f32.mrf.mxu0
      %v744 = vadd.f32 %v670, %v743
      %v745 = vpop.f32.mrf.mxu0
      %746 = vmatprep.mubr.bf16.mxu0 %v704
      %747 = vmatmul.mubr.bf16.gmra.mxu0 %v696
      %v748 = vpop.f32.mrf.mxu0
      %v749 = vadd.f32 %v675, %v748
      %v750 = vpop.f32.mrf.mxu0
      %v751 = vpop.f32.mrf.mxu0
      %v752 = vadd.f32 %v680, %v751
      %v753 = vpop.f32.mrf.mxu0
      %754 = vdwg.mxu0
      %vm755 = vcmp.ge.f32.partialorder %v741, 0.0
      %vm756 = vcmp.ge.f32.partialorder %v744, 0.0
      %vm757 = vcmp.ge.f32.partialorder %v749, 0.0
      %vm758 = vcmp.ge.f32.partialorder %v752, 0.0
      %v759 = vmul.f32 %v741, 0.3
      %v760 = vmul.f32 %v744, 0.3
      %v761 = vmul.f32 %v749, 0.3
      %v762 = vmul.f32 %v752, 0.3
      %v763 = vsel %vm755, %v741, %v759
      %v764 = vsel %vm756, %v744, %v760
      %v765 = vsel %vm757, %v749, %v761
      %v766 = vsel %vm758, %v752, %v762
      %v767 = vpack.c.bf16 %v764, %v763
      %v768 = vpack.c.bf16 %v766, %v765
      %v771 = vunpack.c.l.b16 %v767
      %v772 = vunpack.c.h.b16 %v767
      %v773 = vunpack.c.l.b16 %v768
      %v774 = vunpack.c.h.b16 %v768
      %v775 = vpack.c.b16 %v771, %v771
      %v776 = vpack.c.b16 %v772, %v772
      %v777 = vpack.c.b16 %v773, %v773
      %v778 = vpack.c.b16 %v774, %v774
      %vm783 = vcmask 125952
      %784 = vst.msk [vmem:[%s194] sm:$0xf] %vm783, %v775
      %785 = vst.msk [vmem:[%s194 + $0x4] sm:$0xf] %vm783, %v776
      %786 = vst.msk [vmem:[%s194 + $0x8] sm:$0xf] %vm783, %v777
      %787 = vst.msk [vmem:[%s194 + $0xc] sm:$0xf] %vm783, %v778
      %p788 = scmp.lt.s32.totalorder %s15, 1
      %s789 = scalar_select %p788, %s15, 1
      %s790 = smul.addr %s789, 4
      %s791 = smul.addr %s790, 4
      %s792 = scalar_lea.vmem %s4, %s791
      // Predicated region
      $region37: #{aligner_forward.4} parent=35 // pred_check
        %p793 = pneg %p122
      $region38: #{aligner_forward.4} parent=35 // pred_check_branch
        %795 = sbr.rel (%p793) target = $region40
      $region39: #{aligner_forward.4} parent=35 // pred_region
        _
      $region40: #{aligner_forward.4} parent=35 // pred_fallthru
        _
    $region36: #{aligner_forward.4} parent=5 // pred_fallthru
      _
    %p796 = scmp.le.s32.totalorder 2, %s10
    // Predicated region
    $region41: #{aligner_forward.4} parent=5 // pred_check
      %p797 = pneg %p796
    $region42: #{aligner_forward.4} parent=5 // pred_check_branch
      %799 = sbr.rel (%p797) target = $region44
    $region43: #{aligner_forward.4} parent=5 // pred_region
      %s800 = ssub.s32 %s10, 2
      // Predicated region
      $region45: #{aligner_forward.4} parent=43 // pred_check
        %p801 = pneg %p128
      $region46: #{aligner_forward.4} parent=43 // pred_check_branch
        %803 = sbr.rel (%p801) target = $region48
      $region47: #{aligner_forward.4} parent=43 // pred_region
        %p804 = scmp.lt.s32.totalorder %s16, 1
        %s805 = scalar_select %p804, %s16, 1
        %s806 = smul.addr %s805, 4
        %s807 = smul.addr %s806, 4
        %s808 = scalar_lea.vmem %s4, %s807
      $region48: #{aligner_forward.4} parent=43 // pred_fallthru
        _
    $region44: #{aligner_forward.4} parent=5 // pred_fallthru
      _
  $region6: #{aligner_forward.4} parent=0 // loop_footer
    %s14 = sadd.s32 1, %s10
  $region7: #{aligner_forward.4} parent=0 // loop_footer_branch
    %9 = sbr.rel target = $region3
  $region8: #{aligner_forward.4} parent=0 // loop_exit
    _

</llo_original>
